<compile_context>
chip_gen: v7x
topology: tpu7x:2x2x1
jax: 0.10.0
libtpu: 0.0.40
codegen_flags: <defaults>
</compile_context>

<pallas_src>
import jax
import jax.numpy as jnp
import numpy as np
from jax.experimental import pallas as pl
from jax.experimental.pallas import tpu as pltpu


def _logkey_kernel(x_ref, w_ih0_ref, w_hh0_ref, b0_ref,
                   w_ih1_ref, w_hh1_ref, b1_ref, w_fc_ref, b_fc_ref, out_ref):
    """Whole forward pass in one kernel (everything resident in VMEM).

    x_ref    : (T*B, I)   time-major flattened input (wrapper-side transpose)
    w_ih0_ref: (I, 4H)    layer-0 input weights, pre-transposed
    w_hh0_ref: (H, 4H)    layer-0 recurrent weights, pre-transposed
    b0_ref   : (1, 4H)    layer-0 fused bias (b_ih + b_hh)
    w_ih1_ref: (H, 4H)    layer-1 input weights, pre-transposed
    w_hh1_ref: (H, 4H)    layer-1 recurrent weights, pre-transposed
    b1_ref   : (1, 4H)    layer-1 fused bias
    w_fc_ref : (H, Kp)    head weights, pre-transposed, lane-padded to Kp=128k
    b_fc_ref : (1, Kp)
    out_ref  : (B, Kp)    lane-dense padded output (sliced to K in the wrapper)
    """
    TB, I = x_ref.shape
    H = w_hh0_ref.shape[0]
    B = out_ref.shape[0]
    T = TB // B

    # --- Hoisted layer-0 input projection: one well-shaped matmul, bias folded.
    # (T*B, I) @ (I, 4H) -> reshape to time-major (T, B, 4H) (leading-dim split).
    xproj = (
        jnp.dot(x_ref[...], w_ih0_ref[...], preferred_element_type=jnp.float32)
        + b0_ref[...]
    ).reshape(T, B, 4 * H)

    # --- Loop-invariant loads / broadcasts hoisted out of the recurrence -----
    w_hh0 = w_hh0_ref[...]                                  # (H, 4H)
    w_ih1 = w_ih1_ref[...]                                  # (H, 4H)
    w_hh1 = w_hh1_ref[...]                                  # (H, 4H)
    b1 = jnp.broadcast_to(b1_ref[...], (B, 4 * H))          # broadcast once

    h0 = jnp.zeros((B, H), jnp.float32)
    c0 = jnp.zeros((B, H), jnp.float32)
    h1 = jnp.zeros((B, H), jnp.float32)
    c1 = jnp.zeros((B, H), jnp.float32)

    def gates_to_hc(gates, c):
        # 2 full-width EUP passes over (B, 4H), slices afterwards (i, f, g, o order).
        sig = jax.nn.sigmoid(gates)
        th = jnp.tanh(gates)
        i = sig[:, 0 * H:1 * H]
        f = sig[:, 1 * H:2 * H]
        g = th[:, 2 * H:3 * H]
        o = sig[:, 3 * H:4 * H]
        c_new = f * c + i * g
        h_new = o * jnp.tanh(c_new)
        return h_new, c_new

    # --- Recurrence: fully unrolled (T is small & static) ---------------------
    for t in range(T):
        # Layer 0: only the recurrent matmul remains on the critical path.
        gates0 = xproj[t] + jnp.dot(
            h0, w_hh0, preferred_element_type=jnp.float32)
        h0, c0 = gates_to_hc(gates0, c0)

        # Layer 1: two small dots (no per-step lane-axis concat).
        gates1 = (
            jnp.dot(h0, w_ih1, preferred_element_type=jnp.float32)
            + jnp.dot(h1, w_hh1, preferred_element_type=jnp.float32)
            + b1
        )
        h1, c1 = gates_to_hc(gates1, c1)

    # --- Linear head on the last timestep's top-layer hidden state -----------
    # Lane-dense (B, Kp) store; wrapper slices back to K.
    out_ref[...] = (
        jnp.dot(h1, w_fc_ref[...], preferred_element_type=jnp.float32)
        + b_fc_ref[...]
    )


def logkey_forward(x, packed, *, num_keys):
    """x: (B, T, I) float32, batch_first (PyTorch convention)."""
    B, T, I = x.shape
    k_pad = packed["w_fc_t"].shape[1]

    # Time-major flatten outside the kernel (separate, fully-hidden XLA op).
    x_tm = jnp.transpose(x, (1, 0, 2)).reshape(T * B, I)

    vmem = pl.BlockSpec(memory_space=pltpu.MemorySpace.VMEM)

    # TODO(synk): at large serving batches, add grid=(B//TB,) with
    # dimension_semantics=("parallel",) and per-batch-tile BlockSpecs for x/out
    # to use both v7x TensorCores; at B this small the grid is pure overhead.
    out_padded = pl.pallas_call(
        _logkey_kernel,
        out_shape=jax.ShapeDtypeStruct((B, k_pad), jnp.float32),
        in_specs=[vmem] * 9,
        out_specs=vmem,
    )(
        x_tm,
        packed["w_ih0_t"], packed["w_hh0_t"], packed["b0"],
        packed["w_ih1_t"], packed["w_hh1_t"], packed["b1"],
        packed["w_fc_t"], packed["b_fc"],
    )
    return out_padded[:, :num_keys]


# ------------------------------- parameters ----------------------------------

def init_raw_params(key, input_size, hidden_size, num_keys):
    """PyTorch-shaped weights with U(-1/sqrt(H), 1/sqrt(H)) init."""
    ks = jax.random.split(key, 10)
    s = 1.0 / np.sqrt(hidden_size)

    def u(k, shape):
        return jax.random.uniform(k, shape, jnp.float32, minval=-s, maxval=s)

    return {
        "w_ih0": u(ks[0], (4 * hidden_size, input_size)),
        "w_hh0": u(ks[1], (4 * hidden_size, hidden_size)),
        "b_ih0": u(ks[2], (4 * hidden_size,)),
        "b_hh0": u(ks[3], (4 * hidden_size,)),
        "w_ih1": u(ks[4], (4 * hidden_size, hidden_size)),
        "w_hh1": u(ks[5], (4 * hidden_size, hidden_size)),
        "b_ih1": u(ks[6], (4 * hidden_size,)),
        "b_hh1": u(ks[7], (4 * hidden_size,)),
        "w_fc":  u(ks[8], (num_keys, hidden_size)),
        "b_fc":  u(ks[9], (num_keys,)),
    }


def pack_params(raw):
    """Kernel-ready layout: transposed weights, fused biases, lane-padded head."""
    num_keys, hidden_size = raw["w_fc"].shape
    k_pad = ((num_keys + 127) // 128) * 128

    w_fc_t = jnp.zeros((hidden_size, k_pad), jnp.float32)
    w_fc_t = w_fc_t.at[:, :num_keys].set(raw["w_fc"].T)
    b_fc = jnp.zeros((1, k_pad), jnp.float32)
    b_fc = b_fc.at[:, :num_keys].set(raw["b_fc"].reshape(1, -1))

    return {
        "w_ih0_t": raw["w_ih0"].T,                                   # (I, 4H)
        "w_hh0_t": raw["w_hh0"].T,                                   # (H, 4H)
        "b0": (raw["b_ih0"] + raw["b_hh0"]).reshape(1, -1),          # (1, 4H)
        "w_ih1_t": raw["w_ih1"].T,                                   # (H, 4H)
        "w_hh1_t": raw["w_hh1"].T,                                   # (H, 4H)
        "b1": (raw["b_ih1"] + raw["b_hh1"]).reshape(1, -1),          # (1, 4H)
        "w_fc_t": w_fc_t,                                            # (H, Kp)
        "b_fc": b_fc,                                                # (1, Kp)
    }


# ------------------------------- reference -----------------------------------

def logkey_forward_ref(x, raw, *, hidden_size):
    """Pure-JAX reference implementing literal PyTorch LSTM semantics."""
    B, T, _ = x.shape
    H = hidden_size
    h0 = c0 = h1 = c1 = jnp.zeros((B, H), jnp.float32)

    def cell(x_t, h, c, w_ih, w_hh, b_ih, b_hh):
        gates = x_t @ w_ih.T + b_ih + h @ w_hh.T + b_hh
        i = jax.nn.sigmoid(gates[:, 0 * H:1 * H])
        f = jax.nn.sigmoid(gates[:, 1 * H:2 * H])
        g = jnp.tanh(gates[:, 2 * H:3 * H])
        o = jax.nn.sigmoid(gates[:, 3 * H:4 * H])
        c_new = f * c + i * g
        return o * jnp.tanh(c_new), c_new

    for t in range(T):
        h0, c0 = cell(x[:, t, :], h0, c0,
                      raw["w_ih0"], raw["w_hh0"], raw["b_ih0"], raw["b_hh0"])
        h1, c1 = cell(h0, h1, c1,
                      raw["w_ih1"], raw["w_hh1"], raw["b_ih1"], raw["b_hh1"])
    return h1 @ raw["w_fc"].T + raw["b_fc"]


if __name__ == "__main__":
    # Small shapes consistent with the module; B=8 (per perf review) fills all
    # 8 f32 sublanes in every vector/EUP op while staying tiny.
    B, T, I, H, K = 8, 8, 8, 32, 16

    key = jax.random.PRNGKey(0)
    k_x, k_p = jax.random.split(key)
    x = jax.random.normal(k_x, (B, T, I), dtype=jnp.float32)
    raw = init_raw_params(k_p, I, H, K)
    packed = pack_params(raw)

    out = logkey_forward(x, packed, num_keys=K)
    out = jax.block_until_ready(out)

    ref = jax.block_until_ready(logkey_forward_ref(x, raw, hidden_size=H))
    assert out.shape == (B, K)
    np.testing.assert_allclose(np.asarray(out), np.asarray(ref), rtol=1e-5, atol=1e-5)

    print("KERNEL_OK")
</pallas_src>

<mosaic_0001>
module attributes {stable_mosaic.version = 11 : i64} {
  func.func @_logkey_kernel(%arg0: memref<64x8xf32, #tpu.memory_space<vmem>>, %arg1: memref<8x128xf32, #tpu.memory_space<vmem>>, %arg2: memref<32x128xf32, #tpu.memory_space<vmem>>, %arg3: memref<1x128xf32, #tpu.memory_space<vmem>>, %arg4: memref<32x128xf32, #tpu.memory_space<vmem>>, %arg5: memref<32x128xf32, #tpu.memory_space<vmem>>, %arg6: memref<1x128xf32, #tpu.memory_space<vmem>>, %arg7: memref<32x128xf32, #tpu.memory_space<vmem>>, %arg8: memref<1x128xf32, #tpu.memory_space<vmem>>, %arg9: memref<8x128xf32, #tpu.memory_space<vmem>>) attributes {dimension_semantics = [], scalar_prefetch = 0 : i64, scratch_operands = 0 : i64, tpu.core_type = #tpu.core_type<tc>} {
    %c0 = arith.constant 0 : index
    %c0_0 = arith.constant 0 : index
    %0 = vector.load %arg0[%c0, %c0_0] : memref<64x8xf32, #tpu.memory_space<vmem>>, vector<64x8xf32>
    %c0_1 = arith.constant 0 : index
    %c0_2 = arith.constant 0 : index
    %1 = vector.load %arg1[%c0_1, %c0_2] : memref<8x128xf32, #tpu.memory_space<vmem>>, vector<8x128xf32>
    %cst = arith.constant dense<0.000000e+00> : vector<64x128xf32>
    %2 = tpu.matmul %0, %1, %cst {dimension_numbers = #tpu.dot_dimension_numbers<[1], [0], [0], [1], [0, 0, 1, 1], [], []>} : vector<64x8xf32>, vector<8x128xf32>, vector<64x128xf32> -> vector<64x128xf32>
    %c0_3 = arith.constant 0 : index
    %c0_4 = arith.constant 0 : index
    %3 = vector.load %arg3[%c0_3, %c0_4] : memref<1x128xf32, #tpu.memory_space<vmem>>, vector<1x128xf32>
    %4 = vector.broadcast %3 : vector<1x128xf32> to vector<64x128xf32>
    %5 = arith.addf %2, %4 : vector<64x128xf32>
    %6 = vector.shape_cast %5 : vector<64x128xf32> to vector<8x8x128xf32>
    %c0_5 = arith.constant 0 : index
    %c0_6 = arith.constant 0 : index
    %7 = vector.load %arg2[%c0_5, %c0_6] : memref<32x128xf32, #tpu.memory_space<vmem>>, vector<32x128xf32>
    %c0_7 = arith.constant 0 : index
    %c0_8 = arith.constant 0 : index
    %8 = vector.load %arg4[%c0_7, %c0_8] : memref<32x128xf32, #tpu.memory_space<vmem>>, vector<32x128xf32>
    %c0_9 = arith.constant 0 : index
    %c0_10 = arith.constant 0 : index
    %9 = vector.load %arg5[%c0_9, %c0_10] : memref<32x128xf32, #tpu.memory_space<vmem>>, vector<32x128xf32>
    %c0_11 = arith.constant 0 : index
    %c0_12 = arith.constant 0 : index
    %10 = vector.load %arg6[%c0_11, %c0_12] : memref<1x128xf32, #tpu.memory_space<vmem>>, vector<1x128xf32>
    %11 = vector.shape_cast %10 : vector<1x128xf32> to vector<1x128xf32>
    %12 = vector.broadcast %11 : vector<1x128xf32> to vector<8x128xf32>
    %cst_13 = arith.constant 0.000000e+00 : f32
    %13 = vector.broadcast %cst_13 : f32 to vector<8x32xf32>
    %cst_14 = arith.constant 0.000000e+00 : f32
    %14 = vector.broadcast %cst_14 : f32 to vector<8x32xf32>
    %cst_15 = arith.constant 0.000000e+00 : f32
    %15 = vector.broadcast %cst_15 : f32 to vector<8x32xf32>
    %cst_16 = arith.constant 0.000000e+00 : f32
    %16 = vector.broadcast %cst_16 : f32 to vector<8x32xf32>
    %17 = vector.extract_strided_slice %6 {offsets = [0, 0, 0], sizes = [1, 8, 128], strides = [1, 1, 1]} : vector<8x8x128xf32> to vector<1x8x128xf32>
    %18 = vector.shape_cast %17 : vector<1x8x128xf32> to vector<8x128xf32>
    %cst_17 = arith.constant dense<0.000000e+00> : vector<8x128xf32>
    %19 = tpu.matmul %13, %7, %cst_17 {dimension_numbers = #tpu.dot_dimension_numbers<[1], [0], [0], [1], [0, 0, 1, 1], [], []>} : vector<8x32xf32>, vector<32x128xf32>, vector<8x128xf32> -> vector<8x128xf32>
    %20 = arith.addf %18, %19 : vector<8x128xf32>
    %21 = arith.negf %20 : vector<8x128xf32>
    %22 = math.exp %21 : vector<8x128xf32>
    %cst_18 = arith.constant 1.000000e+00 : f32
    %23 = vector.broadcast %cst_18 : f32 to vector<8x128xf32>
    %24 = arith.addf %23, %22 : vector<8x128xf32>
    %25 = arith.divf %23, %24 : vector<8x128xf32>
    %26 = math.tanh %20 : vector<8x128xf32>
    %27 = vector.extract_strided_slice %25 {offsets = [0, 0], sizes = [8, 32], strides = [1, 1]} : vector<8x128xf32> to vector<8x32xf32>
    %28 = vector.extract_strided_slice %25 {offsets = [0, 32], sizes = [8, 32], strides = [1, 1]} : vector<8x128xf32> to vector<8x32xf32>
    %29 = vector.extract_strided_slice %26 {offsets = [0, 64], sizes = [8, 32], strides = [1, 1]} : vector<8x128xf32> to vector<8x32xf32>
    %30 = vector.extract_strided_slice %25 {offsets = [0, 96], sizes = [8, 32], strides = [1, 1]} : vector<8x128xf32> to vector<8x32xf32>
    %31 = arith.mulf %28, %14 : vector<8x32xf32>
    %32 = arith.mulf %27, %29 : vector<8x32xf32>
    %33 = arith.addf %31, %32 : vector<8x32xf32>
    %34 = math.tanh %33 : vector<8x32xf32>
    %35 = arith.mulf %30, %34 : vector<8x32xf32>
    %cst_19 = arith.constant dense<0.000000e+00> : vector<8x128xf32>
    %36 = tpu.matmul %35, %8, %cst_19 {dimension_numbers = #tpu.dot_dimension_numbers<[1], [0], [0], [1], [0, 0, 1, 1], [], []>} : vector<8x32xf32>, vector<32x128xf32>, vector<8x128xf32> -> vector<8x128xf32>
    %cst_20 = arith.constant dense<0.000000e+00> : vector<8x128xf32>
    %37 = tpu.matmul %15, %9, %cst_20 {dimension_numbers = #tpu.dot_dimension_numbers<[1], [0], [0], [1], [0, 0, 1, 1], [], []>} : vector<8x32xf32>, vector<32x128xf32>, vector<8x128xf32> -> vector<8x128xf32>
    %38 = arith.addf %36, %37 : vector<8x128xf32>
    %39 = arith.addf %38, %12 : vector<8x128xf32>
    %40 = arith.negf %39 : vector<8x128xf32>
    %41 = math.exp %40 : vector<8x128xf32>
    %cst_21 = arith.constant 1.000000e+00 : f32
    %42 = vector.broadcast %cst_21 : f32 to vector<8x128xf32>
    %43 = arith.addf %42, %41 : vector<8x128xf32>
    %44 = arith.divf %42, %43 : vector<8x128xf32>
    %45 = math.tanh %39 : vector<8x128xf32>
    %46 = vector.extract_strided_slice %44 {offsets = [0, 0], sizes = [8, 32], strides = [1, 1]} : vector<8x128xf32> to vector<8x32xf32>
    %47 = vector.extract_strided_slice %44 {offsets = [0, 32], sizes = [8, 32], strides = [1, 1]} : vector<8x128xf32> to vector<8x32xf32>
    %48 = vector.extract_strided_slice %45 {offsets = [0, 64], sizes = [8, 32], strides = [1, 1]} : vector<8x128xf32> to vector<8x32xf32>
    %49 = vector.extract_strided_slice %44 {offsets = [0, 96], sizes = [8, 32], strides = [1, 1]} : vector<8x128xf32> to vector<8x32xf32>
    %50 = arith.mulf %47, %16 : vector<8x32xf32>
    %51 = arith.mulf %46, %48 : vector<8x32xf32>
    %52 = arith.addf %50, %51 : vector<8x32xf32>
    %53 = math.tanh %52 : vector<8x32xf32>
    %54 = arith.mulf %49, %53 : vector<8x32xf32>
    %55 = vector.extract_strided_slice %6 {offsets = [1, 0, 0], sizes = [1, 8, 128], strides = [1, 1, 1]} : vector<8x8x128xf32> to vector<1x8x128xf32>
    %56 = vector.shape_cast %55 : vector<1x8x128xf32> to vector<8x128xf32>
    %cst_22 = arith.constant dense<0.000000e+00> : vector<8x128xf32>
    %57 = tpu.matmul %35, %7, %cst_22 {dimension_numbers = #tpu.dot_dimension_numbers<[1], [0], [0], [1], [0, 0, 1, 1], [], []>} : vector<8x32xf32>, vector<32x128xf32>, vector<8x128xf32> -> vector<8x128xf32>
    %58 = arith.addf %56, %57 : vector<8x128xf32>
    %59 = arith.negf %58 : vector<8x128xf32>
    %60 = math.exp %59 : vector<8x128xf32>
    %cst_23 = arith.constant 1.000000e+00 : f32
    %61 = vector.broadcast %cst_23 : f32 to vector<8x128xf32>
    %62 = arith.addf %61, %60 : vector<8x128xf32>
    %63 = arith.divf %61, %62 : vector<8x128xf32>
    %64 = math.tanh %58 : vector<8x128xf32>
    %65 = vector.extract_strided_slice %63 {offsets = [0, 0], sizes = [8, 32], strides = [1, 1]} : vector<8x128xf32> to vector<8x32xf32>
    %66 = vector.extract_strided_slice %63 {offsets = [0, 32], sizes = [8, 32], strides = [1, 1]} : vector<8x128xf32> to vector<8x32xf32>
    %67 = vector.extract_strided_slice %64 {offsets = [0, 64], sizes = [8, 32], strides = [1, 1]} : vector<8x128xf32> to vector<8x32xf32>
    %68 = vector.extract_strided_slice %63 {offsets = [0, 96], sizes = [8, 32], strides = [1, 1]} : vector<8x128xf32> to vector<8x32xf32>
    %69 = arith.mulf %66, %33 : vector<8x32xf32>
    %70 = arith.mulf %65, %67 : vector<8x32xf32>
    %71 = arith.addf %69, %70 : vector<8x32xf32>
    %72 = math.tanh %71 : vector<8x32xf32>
    %73 = arith.mulf %68, %72 : vector<8x32xf32>
    %cst_24 = arith.constant dense<0.000000e+00> : vector<8x128xf32>
    %74 = tpu.matmul %73, %8, %cst_24 {dimension_numbers = #tpu.dot_dimension_numbers<[1], [0], [0], [1], [0, 0, 1, 1], [], []>} : vector<8x32xf32>, vector<32x128xf32>, vector<8x128xf32> -> vector<8x128xf32>
    %cst_25 = arith.constant dense<0.000000e+00> : vector<8x128xf32>
    %75 = tpu.matmul %54, %9, %cst_25 {dimension_numbers = #tpu.dot_dimension_numbers<[1], [0], [0], [1], [0, 0, 1, 1], [], []>} : vector<8x32xf32>, vector<32x128xf32>, vector<8x128xf32> -> vector<8x128xf32>
    %76 = arith.addf %74, %75 : vector<8x128xf32>
    %77 = arith.addf %76, %12 : vector<8x128xf32>
    %78 = arith.negf %77 : vector<8x128xf32>
    %79 = math.exp %78 : vector<8x128xf32>
    %cst_26 = arith.constant 1.000000e+00 : f32
    %80 = vector.broadcast %cst_26 : f32 to vector<8x128xf32>
    %81 = arith.addf %80, %79 : vector<8x128xf32>
    %82 = arith.divf %80, %81 : vector<8x128xf32>
    %83 = math.tanh %77 : vector<8x128xf32>
    %84 = vector.extract_strided_slice %82 {offsets = [0, 0], sizes = [8, 32], strides = [1, 1]} : vector<8x128xf32> to vector<8x32xf32>
    %85 = vector.extract_strided_slice %82 {offsets = [0, 32], sizes = [8, 32], strides = [1, 1]} : vector<8x128xf32> to vector<8x32xf32>
    %86 = vector.extract_strided_slice %83 {offsets = [0, 64], sizes = [8, 32], strides = [1, 1]} : vector<8x128xf32> to vector<8x32xf32>
    %87 = vector.extract_strided_slice %82 {offsets = [0, 96], sizes = [8, 32], strides = [1, 1]} : vector<8x128xf32> to vector<8x32xf32>
    %88 = arith.mulf %85, %52 : vector<8x32xf32>
    %89 = arith.mulf %84, %86 : vector<8x32xf32>
    %90 = arith.addf %88, %89 : vector<8x32xf32>
    %91 = math.tanh %90 : vector<8x32xf32>
    %92 = arith.mulf %87, %91 : vector<8x32xf32>
    %93 = vector.extract_strided_slice %6 {offsets = [2, 0, 0], sizes = [1, 8, 128], strides = [1, 1, 1]} : vector<8x8x128xf32> to vector<1x8x128xf32>
    %94 = vector.shape_cast %93 : vector<1x8x128xf32> to vector<8x128xf32>
    %cst_27 = arith.constant dense<0.000000e+00> : vector<8x128xf32>
    %95 = tpu.matmul %73, %7, %cst_27 {dimension_numbers = #tpu.dot_dimension_numbers<[1], [0], [0], [1], [0, 0, 1, 1], [], []>} : vector<8x32xf32>, vector<32x128xf32>, vector<8x128xf32> -> vector<8x128xf32>
    %96 = arith.addf %94, %95 : vector<8x128xf32>
    %97 = arith.negf %96 : vector<8x128xf32>
    %98 = math.exp %97 : vector<8x128xf32>
    %cst_28 = arith.constant 1.000000e+00 : f32
    %99 = vector.broadcast %cst_28 : f32 to vector<8x128xf32>
    %100 = arith.addf %99, %98 : vector<8x128xf32>
    %101 = arith.divf %99, %100 : vector<8x128xf32>
    %102 = math.tanh %96 : vector<8x128xf32>
    %103 = vector.extract_strided_slice %101 {offsets = [0, 0], sizes = [8, 32], strides = [1, 1]} : vector<8x128xf32> to vector<8x32xf32>
    %104 = vector.extract_strided_slice %101 {offsets = [0, 32], sizes = [8, 32], strides = [1, 1]} : vector<8x128xf32> to vector<8x32xf32>
    %105 = vector.extract_strided_slice %102 {offsets = [0, 64], sizes = [8, 32], strides = [1, 1]} : vector<8x128xf32> to vector<8x32xf32>
    %106 = vector.extract_strided_slice %101 {offsets = [0, 96], sizes = [8, 32], strides = [1, 1]} : vector<8x128xf32> to vector<8x32xf32>
    %107 = arith.mulf %104, %71 : vector<8x32xf32>
    %108 = arith.mulf %103, %105 : vector<8x32xf32>
    %109 = arith.addf %107, %108 : vector<8x32xf32>
    %110 = math.tanh %109 : vector<8x32xf32>
    %111 = arith.mulf %106, %110 : vector<8x32xf32>
    %cst_29 = arith.constant dense<0.000000e+00> : vector<8x128xf32>
    %112 = tpu.matmul %111, %8, %cst_29 {dimension_numbers = #tpu.dot_dimension_numbers<[1], [0], [0], [1], [0, 0, 1, 1], [], []>} : vector<8x32xf32>, vector<32x128xf32>, vector<8x128xf32> -> vector<8x128xf32>
    %cst_30 = arith.constant dense<0.000000e+00> : vector<8x128xf32>
    %113 = tpu.matmul %92, %9, %cst_30 {dimension_numbers = #tpu.dot_dimension_numbers<[1], [0], [0], [1], [0, 0, 1, 1], [], []>} : vector<8x32xf32>, vector<32x128xf32>, vector<8x128xf32> -> vector<8x128xf32>
    %114 = arith.addf %112, %113 : vector<8x128xf32>
    %115 = arith.addf %114, %12 : vector<8x128xf32>
    %116 = arith.negf %115 : vector<8x128xf32>
    %117 = math.exp %116 : vector<8x128xf32>
    %cst_31 = arith.constant 1.000000e+00 : f32
    %118 = vector.broadcast %cst_31 : f32 to vector<8x128xf32>
    %119 = arith.addf %118, %117 : vector<8x128xf32>
    %120 = arith.divf %118, %119 : vector<8x128xf32>
    %121 = math.tanh %115 : vector<8x128xf32>
    %122 = vector.extract_strided_slice %120 {offsets = [0, 0], sizes = [8, 32], strides = [1, 1]} : vector<8x128xf32> to vector<8x32xf32>
    %123 = vector.extract_strided_slice %120 {offsets = [0, 32], sizes = [8, 32], strides = [1, 1]} : vector<8x128xf32> to vector<8x32xf32>
    %124 = vector.extract_strided_slice %121 {offsets = [0, 64], sizes = [8, 32], strides = [1, 1]} : vector<8x128xf32> to vector<8x32xf32>
    %125 = vector.extract_strided_slice %120 {offsets = [0, 96], sizes = [8, 32], strides = [1, 1]} : vector<8x128xf32> to vector<8x32xf32>
    %126 = arith.mulf %123, %90 : vector<8x32xf32>
    %127 = arith.mulf %122, %124 : vector<8x32xf32>
    %128 = arith.addf %126, %127 : vector<8x32xf32>
    %129 = math.tanh %128 : vector<8x32xf32>
    %130 = arith.mulf %125, %129 : vector<8x32xf32>
    %131 = vector.extract_strided_slice %6 {offsets = [3, 0, 0], sizes = [1, 8, 128], strides = [1, 1, 1]} : vector<8x8x128xf32> to vector<1x8x128xf32>
    %132 = vector.shape_cast %131 : vector<1x8x128xf32> to vector<8x128xf32>
    %cst_32 = arith.constant dense<0.000000e+00> : vector<8x128xf32>
    %133 = tpu.matmul %111, %7, %cst_32 {dimension_numbers = #tpu.dot_dimension_numbers<[1], [0], [0], [1], [0, 0, 1, 1], [], []>} : vector<8x32xf32>, vector<32x128xf32>, vector<8x128xf32> -> vector<8x128xf32>
    %134 = arith.addf %132, %133 : vector<8x128xf32>
    %135 = arith.negf %134 : vector<8x128xf32>
    %136 = math.exp %135 : vector<8x128xf32>
    %cst_33 = arith.constant 1.000000e+00 : f32
    %137 = vector.broadcast %cst_33 : f32 to vector<8x128xf32>
    %138 = arith.addf %137, %136 : vector<8x128xf32>
    %139 = arith.divf %137, %138 : vector<8x128xf32>
    %140 = math.tanh %134 : vector<8x128xf32>
    %141 = vector.extract_strided_slice %139 {offsets = [0, 0], sizes = [8, 32], strides = [1, 1]} : vector<8x128xf32> to vector<8x32xf32>
    %142 = vector.extract_strided_slice %139 {offsets = [0, 32], sizes = [8, 32], strides = [1, 1]} : vector<8x128xf32> to vector<8x32xf32>
    %143 = vector.extract_strided_slice %140 {offsets = [0, 64], sizes = [8, 32], strides = [1, 1]} : vector<8x128xf32> to vector<8x32xf32>
    %144 = vector.extract_strided_slice %139 {offsets = [0, 96], sizes = [8, 32], strides = [1, 1]} : vector<8x128xf32> to vector<8x32xf32>
    %145 = arith.mulf %142, %109 : vector<8x32xf32>
    %146 = arith.mulf %141, %143 : vector<8x32xf32>
    %147 = arith.addf %145, %146 : vector<8x32xf32>
    %148 = math.tanh %147 : vector<8x32xf32>
    %149 = arith.mulf %144, %148 : vector<8x32xf32>
    %cst_34 = arith.constant dense<0.000000e+00> : vector<8x128xf32>
    %150 = tpu.matmul %149, %8, %cst_34 {dimension_numbers = #tpu.dot_dimension_numbers<[1], [0], [0], [1], [0, 0, 1, 1], [], []>} : vector<8x32xf32>, vector<32x128xf32>, vector<8x128xf32> -> vector<8x128xf32>
    %cst_35 = arith.constant dense<0.000000e+00> : vector<8x128xf32>
    %151 = tpu.matmul %130, %9, %cst_35 {dimension_numbers = #tpu.dot_dimension_numbers<[1], [0], [0], [1], [0, 0, 1, 1], [], []>} : vector<8x32xf32>, vector<32x128xf32>, vector<8x128xf32> -> vector<8x128xf32>
    %152 = arith.addf %150, %151 : vector<8x128xf32>
    %153 = arith.addf %152, %12 : vector<8x128xf32>
    %154 = arith.negf %153 : vector<8x128xf32>
    %155 = math.exp %154 : vector<8x128xf32>
    %cst_36 = arith.constant 1.000000e+00 : f32
    %156 = vector.broadcast %cst_36 : f32 to vector<8x128xf32>
    %157 = arith.addf %156, %155 : vector<8x128xf32>
    %158 = arith.divf %156, %157 : vector<8x128xf32>
    %159 = math.tanh %153 : vector<8x128xf32>
    %160 = vector.extract_strided_slice %158 {offsets = [0, 0], sizes = [8, 32], strides = [1, 1]} : vector<8x128xf32> to vector<8x32xf32>
    %161 = vector.extract_strided_slice %158 {offsets = [0, 32], sizes = [8, 32], strides = [1, 1]} : vector<8x128xf32> to vector<8x32xf32>
    %162 = vector.extract_strided_slice %159 {offsets = [0, 64], sizes = [8, 32], strides = [1, 1]} : vector<8x128xf32> to vector<8x32xf32>
    %163 = vector.extract_strided_slice %158 {offsets = [0, 96], sizes = [8, 32], strides = [1, 1]} : vector<8x128xf32> to vector<8x32xf32>
    %164 = arith.mulf %161, %128 : vector<8x32xf32>
    %165 = arith.mulf %160, %162 : vector<8x32xf32>
    %166 = arith.addf %164, %165 : vector<8x32xf32>
    %167 = math.tanh %166 : vector<8x32xf32>
    %168 = arith.mulf %163, %167 : vector<8x32xf32>
    %169 = vector.extract_strided_slice %6 {offsets = [4, 0, 0], sizes = [1, 8, 128], strides = [1, 1, 1]} : vector<8x8x128xf32> to vector<1x8x128xf32>
    %170 = vector.shape_cast %169 : vector<1x8x128xf32> to vector<8x128xf32>
    %cst_37 = arith.constant dense<0.000000e+00> : vector<8x128xf32>
    %171 = tpu.matmul %149, %7, %cst_37 {dimension_numbers = #tpu.dot_dimension_numbers<[1], [0], [0], [1], [0, 0, 1, 1], [], []>} : vector<8x32xf32>, vector<32x128xf32>, vector<8x128xf32> -> vector<8x128xf32>
    %172 = arith.addf %170, %171 : vector<8x128xf32>
    %173 = arith.negf %172 : vector<8x128xf32>
    %174 = math.exp %173 : vector<8x128xf32>
    %cst_38 = arith.constant 1.000000e+00 : f32
    %175 = vector.broadcast %cst_38 : f32 to vector<8x128xf32>
    %176 = arith.addf %175, %174 : vector<8x128xf32>
    %177 = arith.divf %175, %176 : vector<8x128xf32>
    %178 = math.tanh %172 : vector<8x128xf32>
    %179 = vector.extract_strided_slice %177 {offsets = [0, 0], sizes = [8, 32], strides = [1, 1]} : vector<8x128xf32> to vector<8x32xf32>
    %180 = vector.extract_strided_slice %177 {offsets = [0, 32], sizes = [8, 32], strides = [1, 1]} : vector<8x128xf32> to vector<8x32xf32>
    %181 = vector.extract_strided_slice %178 {offsets = [0, 64], sizes = [8, 32], strides = [1, 1]} : vector<8x128xf32> to vector<8x32xf32>
    %182 = vector.extract_strided_slice %177 {offsets = [0, 96], sizes = [8, 32], strides = [1, 1]} : vector<8x128xf32> to vector<8x32xf32>
    %183 = arith.mulf %180, %147 : vector<8x32xf32>
    %184 = arith.mulf %179, %181 : vector<8x32xf32>
    %185 = arith.addf %183, %184 : vector<8x32xf32>
    %186 = math.tanh %185 : vector<8x32xf32>
    %187 = arith.mulf %182, %186 : vector<8x32xf32>
    %cst_39 = arith.constant dense<0.000000e+00> : vector<8x128xf32>
    %188 = tpu.matmul %187, %8, %cst_39 {dimension_numbers = #tpu.dot_dimension_numbers<[1], [0], [0], [1], [0, 0, 1, 1], [], []>} : vector<8x32xf32>, vector<32x128xf32>, vector<8x128xf32> -> vector<8x128xf32>
    %cst_40 = arith.constant dense<0.000000e+00> : vector<8x128xf32>
    %189 = tpu.matmul %168, %9, %cst_40 {dimension_numbers = #tpu.dot_dimension_numbers<[1], [0], [0], [1], [0, 0, 1, 1], [], []>} : vector<8x32xf32>, vector<32x128xf32>, vector<8x128xf32> -> vector<8x128xf32>
    %190 = arith.addf %188, %189 : vector<8x128xf32>
    %191 = arith.addf %190, %12 : vector<8x128xf32>
    %192 = arith.negf %191 : vector<8x128xf32>
    %193 = math.exp %192 : vector<8x128xf32>
    %cst_41 = arith.constant 1.000000e+00 : f32
    %194 = vector.broadcast %cst_41 : f32 to vector<8x128xf32>
    %195 = arith.addf %194, %193 : vector<8x128xf32>
    %196 = arith.divf %194, %195 : vector<8x128xf32>
    %197 = math.tanh %191 : vector<8x128xf32>
    %198 = vector.extract_strided_slice %196 {offsets = [0, 0], sizes = [8, 32], strides = [1, 1]} : vector<8x128xf32> to vector<8x32xf32>
    %199 = vector.extract_strided_slice %196 {offsets = [0, 32], sizes = [8, 32], strides = [1, 1]} : vector<8x128xf32> to vector<8x32xf32>
    %200 = vector.extract_strided_slice %197 {offsets = [0, 64], sizes = [8, 32], strides = [1, 1]} : vector<8x128xf32> to vector<8x32xf32>
    %201 = vector.extract_strided_slice %196 {offsets = [0, 96], sizes = [8, 32], strides = [1, 1]} : vector<8x128xf32> to vector<8x32xf32>
    %202 = arith.mulf %199, %166 : vector<8x32xf32>
    %203 = arith.mulf %198, %200 : vector<8x32xf32>
    %204 = arith.addf %202, %203 : vector<8x32xf32>
    %205 = math.tanh %204 : vector<8x32xf32>
    %206 = arith.mulf %201, %205 : vector<8x32xf32>
    %207 = vector.extract_strided_slice %6 {offsets = [5, 0, 0], sizes = [1, 8, 128], strides = [1, 1, 1]} : vector<8x8x128xf32> to vector<1x8x128xf32>
    %208 = vector.shape_cast %207 : vector<1x8x128xf32> to vector<8x128xf32>
    %cst_42 = arith.constant dense<0.000000e+00> : vector<8x128xf32>
    %209 = tpu.matmul %187, %7, %cst_42 {dimension_numbers = #tpu.dot_dimension_numbers<[1], [0], [0], [1], [0, 0, 1, 1], [], []>} : vector<8x32xf32>, vector<32x128xf32>, vector<8x128xf32> -> vector<8x128xf32>
    %210 = arith.addf %208, %209 : vector<8x128xf32>
    %211 = arith.negf %210 : vector<8x128xf32>
    %212 = math.exp %211 : vector<8x128xf32>
    %cst_43 = arith.constant 1.000000e+00 : f32
    %213 = vector.broadcast %cst_43 : f32 to vector<8x128xf32>
    %214 = arith.addf %213, %212 : vector<8x128xf32>
    %215 = arith.divf %213, %214 : vector<8x128xf32>
    %216 = math.tanh %210 : vector<8x128xf32>
    %217 = vector.extract_strided_slice %215 {offsets = [0, 0], sizes = [8, 32], strides = [1, 1]} : vector<8x128xf32> to vector<8x32xf32>
    %218 = vector.extract_strided_slice %215 {offsets = [0, 32], sizes = [8, 32], strides = [1, 1]} : vector<8x128xf32> to vector<8x32xf32>
    %219 = vector.extract_strided_slice %216 {offsets = [0, 64], sizes = [8, 32], strides = [1, 1]} : vector<8x128xf32> to vector<8x32xf32>
    %220 = vector.extract_strided_slice %215 {offsets = [0, 96], sizes = [8, 32], strides = [1, 1]} : vector<8x128xf32> to vector<8x32xf32>
    %221 = arith.mulf %218, %185 : vector<8x32xf32>
    %222 = arith.mulf %217, %219 : vector<8x32xf32>
    %223 = arith.addf %221, %222 : vector<8x32xf32>
    %224 = math.tanh %223 : vector<8x32xf32>
    %225 = arith.mulf %220, %224 : vector<8x32xf32>
    %cst_44 = arith.constant dense<0.000000e+00> : vector<8x128xf32>
    %226 = tpu.matmul %225, %8, %cst_44 {dimension_numbers = #tpu.dot_dimension_numbers<[1], [0], [0], [1], [0, 0, 1, 1], [], []>} : vector<8x32xf32>, vector<32x128xf32>, vector<8x128xf32> -> vector<8x128xf32>
    %cst_45 = arith.constant dense<0.000000e+00> : vector<8x128xf32>
    %227 = tpu.matmul %206, %9, %cst_45 {dimension_numbers = #tpu.dot_dimension_numbers<[1], [0], [0], [1], [0, 0, 1, 1], [], []>} : vector<8x32xf32>, vector<32x128xf32>, vector<8x128xf32> -> vector<8x128xf32>
    %228 = arith.addf %226, %227 : vector<8x128xf32>
    %229 = arith.addf %228, %12 : vector<8x128xf32>
    %230 = arith.negf %229 : vector<8x128xf32>
    %231 = math.exp %230 : vector<8x128xf32>
    %cst_46 = arith.constant 1.000000e+00 : f32
    %232 = vector.broadcast %cst_46 : f32 to vector<8x128xf32>
    %233 = arith.addf %232, %231 : vector<8x128xf32>
    %234 = arith.divf %232, %233 : vector<8x128xf32>
    %235 = math.tanh %229 : vector<8x128xf32>
    %236 = vector.extract_strided_slice %234 {offsets = [0, 0], sizes = [8, 32], strides = [1, 1]} : vector<8x128xf32> to vector<8x32xf32>
    %237 = vector.extract_strided_slice %234 {offsets = [0, 32], sizes = [8, 32], strides = [1, 1]} : vector<8x128xf32> to vector<8x32xf32>
    %238 = vector.extract_strided_slice %235 {offsets = [0, 64], sizes = [8, 32], strides = [1, 1]} : vector<8x128xf32> to vector<8x32xf32>
    %239 = vector.extract_strided_slice %234 {offsets = [0, 96], sizes = [8, 32], strides = [1, 1]} : vector<8x128xf32> to vector<8x32xf32>
    %240 = arith.mulf %237, %204 : vector<8x32xf32>
    %241 = arith.mulf %236, %238 : vector<8x32xf32>
    %242 = arith.addf %240, %241 : vector<8x32xf32>
    %243 = math.tanh %242 : vector<8x32xf32>
    %244 = arith.mulf %239, %243 : vector<8x32xf32>
    %245 = vector.extract_strided_slice %6 {offsets = [6, 0, 0], sizes = [1, 8, 128], strides = [1, 1, 1]} : vector<8x8x128xf32> to vector<1x8x128xf32>
    %246 = vector.shape_cast %245 : vector<1x8x128xf32> to vector<8x128xf32>
    %cst_47 = arith.constant dense<0.000000e+00> : vector<8x128xf32>
    %247 = tpu.matmul %225, %7, %cst_47 {dimension_numbers = #tpu.dot_dimension_numbers<[1], [0], [0], [1], [0, 0, 1, 1], [], []>} : vector<8x32xf32>, vector<32x128xf32>, vector<8x128xf32> -> vector<8x128xf32>
    %248 = arith.addf %246, %247 : vector<8x128xf32>
    %249 = arith.negf %248 : vector<8x128xf32>
    %250 = math.exp %249 : vector<8x128xf32>
    %cst_48 = arith.constant 1.000000e+00 : f32
    %251 = vector.broadcast %cst_48 : f32 to vector<8x128xf32>
    %252 = arith.addf %251, %250 : vector<8x128xf32>
    %253 = arith.divf %251, %252 : vector<8x128xf32>
    %254 = math.tanh %248 : vector<8x128xf32>
    %255 = vector.extract_strided_slice %253 {offsets = [0, 0], sizes = [8, 32], strides = [1, 1]} : vector<8x128xf32> to vector<8x32xf32>
    %256 = vector.extract_strided_slice %253 {offsets = [0, 32], sizes = [8, 32], strides = [1, 1]} : vector<8x128xf32> to vector<8x32xf32>
    %257 = vector.extract_strided_slice %254 {offsets = [0, 64], sizes = [8, 32], strides = [1, 1]} : vector<8x128xf32> to vector<8x32xf32>
    %258 = vector.extract_strided_slice %253 {offsets = [0, 96], sizes = [8, 32], strides = [1, 1]} : vector<8x128xf32> to vector<8x32xf32>
    %259 = arith.mulf %256, %223 : vector<8x32xf32>
    %260 = arith.mulf %255, %257 : vector<8x32xf32>
    %261 = arith.addf %259, %260 : vector<8x32xf32>
    %262 = math.tanh %261 : vector<8x32xf32>
    %263 = arith.mulf %258, %262 : vector<8x32xf32>
    %cst_49 = arith.constant dense<0.000000e+00> : vector<8x128xf32>
    %264 = tpu.matmul %263, %8, %cst_49 {dimension_numbers = #tpu.dot_dimension_numbers<[1], [0], [0], [1], [0, 0, 1, 1], [], []>} : vector<8x32xf32>, vector<32x128xf32>, vector<8x128xf32> -> vector<8x128xf32>
    %cst_50 = arith.constant dense<0.000000e+00> : vector<8x128xf32>
    %265 = tpu.matmul %244, %9, %cst_50 {dimension_numbers = #tpu.dot_dimension_numbers<[1], [0], [0], [1], [0, 0, 1, 1], [], []>} : vector<8x32xf32>, vector<32x128xf32>, vector<8x128xf32> -> vector<8x128xf32>
    %266 = arith.addf %264, %265 : vector<8x128xf32>
    %267 = arith.addf %266, %12 : vector<8x128xf32>
    %268 = arith.negf %267 : vector<8x128xf32>
    %269 = math.exp %268 : vector<8x128xf32>
    %cst_51 = arith.constant 1.000000e+00 : f32
    %270 = vector.broadcast %cst_51 : f32 to vector<8x128xf32>
    %271 = arith.addf %270, %269 : vector<8x128xf32>
    %272 = arith.divf %270, %271 : vector<8x128xf32>
    %273 = math.tanh %267 : vector<8x128xf32>
    %274 = vector.extract_strided_slice %272 {offsets = [0, 0], sizes = [8, 32], strides = [1, 1]} : vector<8x128xf32> to vector<8x32xf32>
    %275 = vector.extract_strided_slice %272 {offsets = [0, 32], sizes = [8, 32], strides = [1, 1]} : vector<8x128xf32> to vector<8x32xf32>
    %276 = vector.extract_strided_slice %273 {offsets = [0, 64], sizes = [8, 32], strides = [1, 1]} : vector<8x128xf32> to vector<8x32xf32>
    %277 = vector.extract_strided_slice %272 {offsets = [0, 96], sizes = [8, 32], strides = [1, 1]} : vector<8x128xf32> to vector<8x32xf32>
    %278 = arith.mulf %275, %242 : vector<8x32xf32>
    %279 = arith.mulf %274, %276 : vector<8x32xf32>
    %280 = arith.addf %278, %279 : vector<8x32xf32>
    %281 = math.tanh %280 : vector<8x32xf32>
    %282 = arith.mulf %277, %281 : vector<8x32xf32>
    %283 = vector.extract_strided_slice %6 {offsets = [7, 0, 0], sizes = [1, 8, 128], strides = [1, 1, 1]} : vector<8x8x128xf32> to vector<1x8x128xf32>
    %284 = vector.shape_cast %283 : vector<1x8x128xf32> to vector<8x128xf32>
    %cst_52 = arith.constant dense<0.000000e+00> : vector<8x128xf32>
    %285 = tpu.matmul %263, %7, %cst_52 {dimension_numbers = #tpu.dot_dimension_numbers<[1], [0], [0], [1], [0, 0, 1, 1], [], []>} : vector<8x32xf32>, vector<32x128xf32>, vector<8x128xf32> -> vector<8x128xf32>
    %286 = arith.addf %284, %285 : vector<8x128xf32>
    %287 = arith.negf %286 : vector<8x128xf32>
    %288 = math.exp %287 : vector<8x128xf32>
    %cst_53 = arith.constant 1.000000e+00 : f32
    %289 = vector.broadcast %cst_53 : f32 to vector<8x128xf32>
    %290 = arith.addf %289, %288 : vector<8x128xf32>
    %291 = arith.divf %289, %290 : vector<8x128xf32>
    %292 = math.tanh %286 : vector<8x128xf32>
    %293 = vector.extract_strided_slice %291 {offsets = [0, 0], sizes = [8, 32], strides = [1, 1]} : vector<8x128xf32> to vector<8x32xf32>
    %294 = vector.extract_strided_slice %291 {offsets = [0, 32], sizes = [8, 32], strides = [1, 1]} : vector<8x128xf32> to vector<8x32xf32>
    %295 = vector.extract_strided_slice %292 {offsets = [0, 64], sizes = [8, 32], strides = [1, 1]} : vector<8x128xf32> to vector<8x32xf32>
    %296 = vector.extract_strided_slice %291 {offsets = [0, 96], sizes = [8, 32], strides = [1, 1]} : vector<8x128xf32> to vector<8x32xf32>
    %297 = arith.mulf %294, %261 : vector<8x32xf32>
    %298 = arith.mulf %293, %295 : vector<8x32xf32>
    %299 = arith.addf %297, %298 : vector<8x32xf32>
    %300 = math.tanh %299 : vector<8x32xf32>
    %301 = arith.mulf %296, %300 : vector<8x32xf32>
    %cst_54 = arith.constant dense<0.000000e+00> : vector<8x128xf32>
    %302 = tpu.matmul %301, %8, %cst_54 {dimension_numbers = #tpu.dot_dimension_numbers<[1], [0], [0], [1], [0, 0, 1, 1], [], []>} : vector<8x32xf32>, vector<32x128xf32>, vector<8x128xf32> -> vector<8x128xf32>
    %cst_55 = arith.constant dense<0.000000e+00> : vector<8x128xf32>
    %303 = tpu.matmul %282, %9, %cst_55 {dimension_numbers = #tpu.dot_dimension_numbers<[1], [0], [0], [1], [0, 0, 1, 1], [], []>} : vector<8x32xf32>, vector<32x128xf32>, vector<8x128xf32> -> vector<8x128xf32>
    %304 = arith.addf %302, %303 : vector<8x128xf32>
    %305 = arith.addf %304, %12 : vector<8x128xf32>
    %306 = arith.negf %305 : vector<8x128xf32>
    %307 = math.exp %306 : vector<8x128xf32>
    %cst_56 = arith.constant 1.000000e+00 : f32
    %308 = vector.broadcast %cst_56 : f32 to vector<8x128xf32>
    %309 = arith.addf %308, %307 : vector<8x128xf32>
    %310 = arith.divf %308, %309 : vector<8x128xf32>
    %311 = math.tanh %305 : vector<8x128xf32>
    %312 = vector.extract_strided_slice %310 {offsets = [0, 0], sizes = [8, 32], strides = [1, 1]} : vector<8x128xf32> to vector<8x32xf32>
    %313 = vector.extract_strided_slice %310 {offsets = [0, 32], sizes = [8, 32], strides = [1, 1]} : vector<8x128xf32> to vector<8x32xf32>
    %314 = vector.extract_strided_slice %311 {offsets = [0, 64], sizes = [8, 32], strides = [1, 1]} : vector<8x128xf32> to vector<8x32xf32>
    %315 = vector.extract_strided_slice %310 {offsets = [0, 96], sizes = [8, 32], strides = [1, 1]} : vector<8x128xf32> to vector<8x32xf32>
    %316 = arith.mulf %313, %280 : vector<8x32xf32>
    %317 = arith.mulf %312, %314 : vector<8x32xf32>
    %318 = arith.addf %316, %317 : vector<8x32xf32>
    %319 = math.tanh %318 : vector<8x32xf32>
    %320 = arith.mulf %315, %319 : vector<8x32xf32>
    %c0_57 = arith.constant 0 : index
    %c0_58 = arith.constant 0 : index
    %321 = vector.load %arg7[%c0_57, %c0_58] : memref<32x128xf32, #tpu.memory_space<vmem>>, vector<32x128xf32>
    %cst_59 = arith.constant dense<0.000000e+00> : vector<8x128xf32>
    %322 = tpu.matmul %320, %321, %cst_59 {dimension_numbers = #tpu.dot_dimension_numbers<[1], [0], [0], [1], [0, 0, 1, 1], [], []>} : vector<8x32xf32>, vector<32x128xf32>, vector<8x128xf32> -> vector<8x128xf32>
    %c0_60 = arith.constant 0 : index
    %c0_61 = arith.constant 0 : index
    %323 = vector.load %arg8[%c0_60, %c0_61] : memref<1x128xf32, #tpu.memory_space<vmem>>, vector<1x128xf32>
    %324 = vector.broadcast %323 : vector<1x128xf32> to vector<8x128xf32>
    %325 = arith.addf %322, %324 : vector<8x128xf32>
    %c0_62 = arith.constant 0 : index
    %c0_63 = arith.constant 0 : index
    %326 = vector.load %arg9[%c0_62, %c0_63] : memref<8x128xf32, #tpu.memory_space<vmem>>, vector<8x128xf32>
    tpu.vector_store %arg9[%c0_62, %c0_63], %325 {strides = array<i32>} : memref<8x128xf32, #tpu.memory_space<vmem>>, vector<8x128xf32>,
    return
  }
}

</mosaic_0001>

<llo_original>
// kernel: tpu_custom_call.1
$region0: #{tpu_custom_call.1}
  #allocation0 [shape = 'u32[]', space=smem, size = 0x4, offset = 0x4, fixed_abs, tag = 'smem constant byte address 0x4 - core index']
  #allocation1 [shape = 'u32[144,128]{1,0:T(1,128)}', space=vmem, size = 0x12000, scoped, tag = 'internal scratch']
  %s0 = inlined_call_operand.vmem [shape: f32[64,8], index: 0, kind: input, shape index: {}]
  %s1 = inlined_call_operand.hbm [shape: f32[8,128], index: 1, kind: input, shape index: {}]
  %s2 = inlined_call_operand.vmem [shape: f32[32,128], index: 2, kind: input, shape index: {}]
  %s3 = inlined_call_operand.vmem [shape: f32[1,128], index: 3, kind: input, shape index: {}]
  %s4 = inlined_call_operand.vmem [shape: f32[32,128], index: 4, kind: input, shape index: {}]
  %s5 = inlined_call_operand.hbm [shape: f32[32,128], index: 5, kind: input, shape index: {}]
  %s6 = inlined_call_operand.vmem [shape: f32[1,128], index: 6, kind: input, shape index: {}]
  %s7 = inlined_call_operand.vmem [shape: f32[32,128], index: 7, kind: input, shape index: {}]
  %s8 = inlined_call_operand.vmem [shape: f32[1,128], index: 8, kind: input, shape index: {}]
  %s9 = inlined_call_operand.hbm [shape: f32[8,128], index: 9, kind: output, shape index: {}]
  %s10 = sld [smem:[#allocation0]]
  $region54: #{tpu_custom_call.1} parent=0
    _
  %s12 = ssub.s32 1, %s10
  %s13 = scalar_select 0, %s12, %s10
  $region1: #{tpu_custom_call.1} parent=0
    #allocation2 [shape = 'u8[4096]{0}', space=vmem, size = 0x1000, scoped, tag = 'input window, operand 1, single buffered']
    #allocation3 [shape = 's32[1]{0}', space=sflag, size = 0x4, scoped, tag = 'scoped memory for tpu_custom_call.1']
    #allocation4 [shape = 's32[1]{0}', space=sflag, size = 0x4, scoped, tag = 'scoped memory for tpu_custom_call.1']
    #allocation5 [shape = 'u8[16384]{0}', space=vmem, size = 0x4000, scoped, tag = 'input window, operand 5, single buffered']
    #allocation6 [shape = 's32[1]{0}', space=sflag, size = 0x4, scoped, tag = 'scoped memory for tpu_custom_call.1']
    #allocation7 [shape = 'u8[4096]{0}', space=vmem, size = 0x1000, scoped, tag = 'output window, operand 0, single buffered']
    %14 = vsyncpa [#allocation3], 0
    %15 = vsyncpa [#allocation6], 0
    %16 = vsyncpa [#allocation4], 0
    // Predicated region
    $region2: #{tpu_custom_call.1} parent=1 // pred_check
      _
    $region3: #{tpu_custom_call.1} parent=1 // pred_check_branch
      %18 = sbr.rel (0) target = $region5
    $region4: #{tpu_custom_call.1} parent=1 // pred_region
      _
    $region5: #{tpu_custom_call.1} parent=1 // pred_fallthru
      _
    // Predicated region
    $region6: #{tpu_custom_call.1} parent=1 // pred_check
      _
    $region7: #{tpu_custom_call.1} parent=1 // pred_check_branch
      %20 = sbr.rel (0) target = $region9
    $region8: #{tpu_custom_call.1} parent=1 // pred_region
      %s22 = ssub.s32 128, 128
      %23 = vsyncadd [#allocation3], %s22
      %s25 = sshll.u32 [#allocation2], 4
      %s26 = int_to_ptr.vmem [resolvable:$true] %s25
      %28 = dma.hbm_to_vmem [thread:$0]  %s1, 128, %s26, [#allocation3]
    $region9: #{tpu_custom_call.1} parent=1 // pred_fallthru
      _
    // Predicated region
    $region10: #{tpu_custom_call.1} parent=1 // pred_check
      _
    $region11: #{tpu_custom_call.1} parent=1 // pred_check_branch
      %30 = sbr.rel (0) target = $region13
    $region12: #{tpu_custom_call.1} parent=1 // pred_region
      _
    $region13: #{tpu_custom_call.1} parent=1 // pred_fallthru
      _
    // Predicated region
    $region14: #{tpu_custom_call.1} parent=1 // pred_check
      _
    $region15: #{tpu_custom_call.1} parent=1 // pred_check_branch
      %32 = sbr.rel (0) target = $region17
    $region16: #{tpu_custom_call.1} parent=1 // pred_region
      _
    $region17: #{tpu_custom_call.1} parent=1 // pred_fallthru
      _
    // Predicated region
    $region18: #{tpu_custom_call.1} parent=1 // pred_check
      _
    $region19: #{tpu_custom_call.1} parent=1 // pred_check_branch
      %34 = sbr.rel (0) target = $region21
    $region20: #{tpu_custom_call.1} parent=1 // pred_region
      _
    $region21: #{tpu_custom_call.1} parent=1 // pred_fallthru
      _
    // Predicated region
    $region22: #{tpu_custom_call.1} parent=1 // pred_check
      _
    $region23: #{tpu_custom_call.1} parent=1 // pred_check_branch
      %36 = sbr.rel (0) target = $region25
    $region24: #{tpu_custom_call.1} parent=1 // pred_region
      %s38 = ssub.s32 512, 512
      %39 = vsyncadd [#allocation6], %s38
      %s40 = sshll.u32 [#allocation5], 4
      %s41 = int_to_ptr.vmem [resolvable:$true] %s40
      %46 = dma.hbm_to_vmem [thread:$0]  %s5, 512, %s41, [#allocation6], 128, 128, 8
    $region25: #{tpu_custom_call.1} parent=1 // pred_fallthru
      _
    // Predicated region
    $region26: #{tpu_custom_call.1} parent=1 // pred_check
      _
    $region27: #{tpu_custom_call.1} parent=1 // pred_check_branch
      %48 = sbr.rel (0) target = $region29
    $region28: #{tpu_custom_call.1} parent=1 // pred_region
      _
    $region29: #{tpu_custom_call.1} parent=1 // pred_fallthru
      _
    // Predicated region
    $region30: #{tpu_custom_call.1} parent=1 // pred_check
      _
    $region31: #{tpu_custom_call.1} parent=1 // pred_check_branch
      %50 = sbr.rel (0) target = $region33
    $region32: #{tpu_custom_call.1} parent=1 // pred_region
      _
    $region33: #{tpu_custom_call.1} parent=1 // pred_fallthru
      _
    // Predicated region
    $region34: #{tpu_custom_call.1} parent=1 // pred_check
      _
    $region35: #{tpu_custom_call.1} parent=1 // pred_check_branch
      %52 = sbr.rel (0) target = $region37
    $region36: #{tpu_custom_call.1} parent=1 // pred_region
      _
    $region37: #{tpu_custom_call.1} parent=1 // pred_fallthru
      _
    // Predicated region
    $region38: #{tpu_custom_call.1} parent=1 // pred_check
      _
    $region39: #{tpu_custom_call.1} parent=1 // pred_check_branch
      %54 = sbr.rel (0) target = $region41
    $region40: #{tpu_custom_call.1} parent=1 // pred_region
      %55 = dma.done [#allocation3], 128
    $region41: #{tpu_custom_call.1} parent=1 // pred_fallthru
      _
    // Predicated region
    $region42: #{tpu_custom_call.1} parent=1 // pred_check
      _
    $region43: #{tpu_custom_call.1} parent=1 // pred_check_branch
      %57 = sbr.rel (0) target = $region45
    $region44: #{tpu_custom_call.1} parent=1 // pred_region
      %58 = dma.done [#allocation6], 512
    $region45: #{tpu_custom_call.1} parent=1 // pred_fallthru
      _
    %v59 = vld [vmem:[%s0] sm:$0xff]
    %v60 = vld [vmem:[%s0 + $0x8] sm:$0xff]
    %v61 = vld [vmem:[%s0 + $0x10] sm:$0xff]
    %v62 = vld [vmem:[%s0 + $0x18] sm:$0xff]
    %v63 = vld [vmem:[%s0 + $0x20] sm:$0xff]
    %v64 = vld [vmem:[%s0 + $0x28] sm:$0xff]
    %v65 = vld [vmem:[%s0 + $0x30] sm:$0xff]
    %v66 = vld [vmem:[%s0 + $0x38] sm:$0xff]
    %v67 = vld [vmem:[#allocation2] sm:$0xff]
    %v68 = vld [vmem:[%s3] sm:$0x1]
    %v70 = vlaneseq
    %v71 = vshrl.u32 %v70, 7
    %v72 = vsub.s32 0, %v71
    %v73 = vrot.slane %v68, %v72
    %vm75 = vcmask 64512
    %v77 = vsel %vm75, %v59, 0
    %v80 = vsel %vm75, %v60, 0
    %v83 = vsel %vm75, %v61, 0
    %v86 = vsel %vm75, %v62, 0
    %v89 = vsel %vm75, %v63, 0
    %v92 = vsel %vm75, %v64, 0
    %v95 = vsel %vm75, %v65, 0
    %v98 = vsel %vm75, %v66, 0
    %100 = vmatprep.subr.mxu0 0.0
    %101 = vmatpush1.msra.mxu0 %v67
    %102 = vmatprep.subr.mxu0 0.0
    %103 = vmatpush1.msra.mxu0 0.0
    %104 = vmatprep.subr.mxu0 0.0
    %105 = vmatpush1.msra.mxu0 0.0
    %106 = vmatprep.subr.mxu0 0.0
    %107 = vmatpush1.msra.mxu0 0.0
    %108 = vmatprep.subr.mxu0 0.0
    %109 = vmatpush1.msra.mxu0 0.0
    %110 = vmatprep.subr.mxu0 0.0
    %111 = vmatpush1.msra.mxu0 0.0
    %112 = vmatprep.subr.mxu0 0.0
    %113 = vmatpush1.msra.mxu0 0.0
    %114 = vmatprep.subr.mxu0 0.0
    %115 = vmatpush1.msra.mxu0 0.0
    %116 = vmatprep.subr.mxu0 0.0
    %117 = vmatpush1.msra.mxu0 0.0
    %118 = vmatprep.subr.mxu0 0.0
    %119 = vmatpush1.msra.mxu0 0.0
    %120 = vmatprep.subr.mxu0 0.0
    %121 = vmatpush1.msra.mxu0 0.0
    %122 = vmatprep.subr.mxu0 0.0
    %123 = vmatpush1.msra.mxu0 0.0
    %124 = vmatprep.subr.mxu0 0.0
    %125 = vmatpush1.msra.mxu0 0.0
    %126 = vmatprep.subr.mxu0 0.0
    %127 = vmatpush1.msra.mxu0 0.0
    %128 = vmatprep.subr.mxu0 0.0
    %129 = vmatpush1.msra.mxu0 0.0
    %130 = vmatprep.subr.mxu0 0.0
    %131 = vmatpush1.msra.mxu0 0.0
    %132 = vmatprep.subr.mxu0 0.0
    %133 = vmatpush1.msra.mxu0 0.0
    %134 = vmatprep.subr.mxu0 0.0
    %135 = vmatpush1.msra.mxu0 0.0
    %136 = vmatprep.subr.mxu0 0.0
    %137 = vmatpush1.msra.mxu0 0.0
    %138 = vmatprep.subr.mxu0 0.0
    %139 = vmatpush1.msra.mxu0 0.0
    %140 = vmatprep.subr.mxu0 0.0
    %141 = vmatpush1.msra.mxu0 0.0
    %142 = vmatprep.subr.mxu0 0.0
    %143 = vmatpush1.msra.mxu0 0.0
    %144 = vmatprep.subr.mxu0 0.0
    %145 = vmatpush1.msra.mxu0 0.0
    %146 = vmatprep.subr.mxu0 0.0
    %147 = vmatpush1.msra.mxu0 0.0
    %148 = vmatprep.subr.mxu0 0.0
    %149 = vmatpush1.msra.mxu0 0.0
    %150 = vmatprep.subr.mxu0 0.0
    %151 = vmatpush1.msra.mxu0 0.0
    %152 = vmatprep.subr.mxu0 0.0
    %153 = vmatpush1.msra.mxu0 0.0
    %154 = vmatprep.subr.mxu0 0.0
    %155 = vmatpush1.msra.mxu0 0.0
    %156 = vmatprep.subr.mxu0 0.0
    %157 = vmatpush1.msra.mxu0 0.0
    %158 = vmatprep.subr.mxu0 0.0
    %159 = vmatpush1.msra.mxu0 0.0
    %160 = vmatprep.subr.mxu0 0.0
    %161 = vmatpush1.msra.mxu0 0.0
    %162 = vmatprep.subr.mxu0 0.0
    %163 = vmatpush1.msra.mxu0 0.0
    %164 = vmatprep.mubr.f32.mxu0 0.0
    %165 = vmatmul.mubr.f32.gmra.mrb[0].mxu0 %v77
    %v166 = vpop.f32.mrb[0].mxu0
    %v167 = vadd.f32 %v73, %v166
    %v168 = vpop.f32.mrb[0].mxu0
    %169 = vmatprep.mubr.f32.mxu0 0.0
    %170 = vmatmul.mubr.f32.gmra.mrb[0].mxu0 %v80
    %v171 = vpop.f32.mrb[0].mxu0
    %v172 = vadd.f32 %v73, %v171
    %v173 = vpop.f32.mrb[0].mxu0
    %174 = vmatprep.mubr.f32.mxu0 0.0
    %175 = vmatmul.mubr.f32.gmra.mrb[0].mxu0 %v83
    %v176 = vpop.f32.mrb[0].mxu0
    %v177 = vadd.f32 %v73, %v176
    %v178 = vpop.f32.mrb[0].mxu0
    %179 = vmatprep.mubr.f32.mxu0 0.0
    %180 = vmatmul.mubr.f32.gmra.mrb[0].mxu0 %v86
    %v181 = vpop.f32.mrb[0].mxu0
    %v182 = vadd.f32 %v73, %v181
    %v183 = vpop.f32.mrb[0].mxu0
    %184 = vmatprep.mubr.f32.mxu0 0.0
    %185 = vmatmul.mubr.f32.gmra.mrb[0].mxu0 %v89
    %v186 = vpop.f32.mrb[0].mxu0
    %v187 = vadd.f32 %v73, %v186
    %v188 = vpop.f32.mrb[0].mxu0
    %189 = vmatprep.mubr.f32.mxu0 0.0
    %190 = vmatmul.mubr.f32.gmra.mrb[0].mxu0 %v92
    %v191 = vpop.f32.mrb[0].mxu0
    %v192 = vadd.f32 %v73, %v191
    %v193 = vpop.f32.mrb[0].mxu0
    %194 = vmatprep.mubr.f32.mxu0 0.0
    %195 = vmatmul.mubr.f32.gmra.mrb[0].mxu0 %v95
    %v196 = vpop.f32.mrb[0].mxu0
    %v197 = vadd.f32 %v73, %v196
    %v198 = vpop.f32.mrb[0].mxu0
    %199 = vmatprep.mubr.f32.mxu0 0.0
    %200 = vmatmul.mubr.f32.gmra.mrb[0].mxu0 %v98
    %v201 = vpop.f32.mrb[0].mxu0
    %v202 = vadd.f32 %v73, %v201
    %v203 = vpop.f32.mrb[0].mxu0
    %204 = vdwg.mxu0
    %v205 = vld [vmem:[%s2] sm:$0xff]
    %v206 = vld [vmem:[%s2 + $0x8] sm:$0xff]
    %v207 = vld [vmem:[%s2 + $0x10] sm:$0xff]
    %v208 = vld [vmem:[%s2 + $0x18] sm:$0xff]
    %v209 = vld [vmem:[%s4] sm:$0xff]
    %v210 = vld [vmem:[%s4 + $0x8] sm:$0xff]
    %v211 = vld [vmem:[%s4 + $0x10] sm:$0xff]
    %v212 = vld [vmem:[%s4 + $0x18] sm:$0xff]
    %v213 = vld [vmem:[#allocation5] sm:$0xff]
    %v214 = vld [vmem:[#allocation5 + $0x8] sm:$0xff]
    %v215 = vld [vmem:[#allocation5 + $0x10] sm:$0xff]
    %v216 = vld [vmem:[#allocation5 + $0x18] sm:$0xff]
    %v217 = vld [vmem:[%s6] sm:$0x1]
    %v219 = vlaneseq
    %v220 = vshrl.u32 %v219, 7
    %v221 = vsub.s32 0, %v220
    %v222 = vrot.slane %v217, %v221
    %vm224 = vcmask 261120
    %v226 = vsel %vm224, 0.0, 0
    %228 = vmatprep.subr.mxu0 0.0
    %229 = vmatpush1.msra.mxu0 %v205
    %230 = vmatprep.subr.mxu0 0.0
    %231 = vmatpush1.msra.mxu0 %v206
    %232 = vmatprep.subr.mxu0 0.0
    %233 = vmatpush1.msra.mxu0 %v207
    %234 = vmatprep.subr.mxu0 0.0
    %235 = vmatpush1.msra.mxu0 %v208
    %236 = vmatprep.subr.mxu0 0.0
    %237 = vmatpush1.msra.mxu0 0.0
    %238 = vmatprep.subr.mxu0 0.0
    %239 = vmatpush1.msra.mxu0 0.0
    %240 = vmatprep.subr.mxu0 0.0
    %241 = vmatpush1.msra.mxu0 0.0
    %242 = vmatprep.subr.mxu0 0.0
    %243 = vmatpush1.msra.mxu0 0.0
    %244 = vmatprep.subr.mxu0 0.0
    %245 = vmatpush1.msra.mxu0 0.0
    %246 = vmatprep.subr.mxu0 0.0
    %247 = vmatpush1.msra.mxu0 0.0
    %248 = vmatprep.subr.mxu0 0.0
    %249 = vmatpush1.msra.mxu0 0.0
    %250 = vmatprep.subr.mxu0 0.0
    %251 = vmatpush1.msra.mxu0 0.0
    %252 = vmatprep.subr.mxu0 0.0
    %253 = vmatpush1.msra.mxu0 0.0
    %254 = vmatprep.subr.mxu0 0.0
    %255 = vmatpush1.msra.mxu0 0.0
    %256 = vmatprep.subr.mxu0 0.0
    %257 = vmatpush1.msra.mxu0 0.0
    %258 = vmatprep.subr.mxu0 0.0
    %259 = vmatpush1.msra.mxu0 0.0
    %260 = vmatprep.subr.mxu0 0.0
    %261 = vmatpush1.msra.mxu0 0.0
    %262 = vmatprep.subr.mxu0 0.0
    %263 = vmatpush1.msra.mxu0 0.0
    %264 = vmatprep.subr.mxu0 0.0
    %265 = vmatpush1.msra.mxu0 0.0
    %266 = vmatprep.subr.mxu0 0.0
    %267 = vmatpush1.msra.mxu0 0.0
    %268 = vmatprep.subr.mxu0 0.0
    %269 = vmatpush1.msra.mxu0 0.0
    %270 = vmatprep.subr.mxu0 0.0
    %271 = vmatpush1.msra.mxu0 0.0
    %272 = vmatprep.subr.mxu0 0.0
    %273 = vmatpush1.msra.mxu0 0.0
    %274 = vmatprep.subr.mxu0 0.0
    %275 = vmatpush1.msra.mxu0 0.0
    %276 = vmatprep.subr.mxu0 0.0
    %277 = vmatpush1.msra.mxu0 0.0
    %278 = vmatprep.subr.mxu0 0.0
    %279 = vmatpush1.msra.mxu0 0.0
    %280 = vmatprep.subr.mxu0 0.0
    %281 = vmatpush1.msra.mxu0 0.0
    %282 = vmatprep.subr.mxu0 0.0
    %283 = vmatpush1.msra.mxu0 0.0
    %284 = vmatprep.subr.mxu0 0.0
    %285 = vmatpush1.msra.mxu0 0.0
    %286 = vmatprep.subr.mxu0 0.0
    %287 = vmatpush1.msra.mxu0 0.0
    %288 = vmatprep.subr.mxu0 0.0
    %289 = vmatpush1.msra.mxu0 0.0
    %290 = vmatprep.subr.mxu0 0.0
    %291 = vmatpush1.msra.mxu0 0.0
    %292 = vmatprep.mubr.f32.mxu0 0.0
    %293 = vmatmul.mubr.f32.gmra.mrb[0].mxu0 %v226
    %v294 = vpop.f32.mrb[0].mxu0
    %v295 = vadd.f32 0.0, %v294
    %v296 = vpop.f32.mrb[0].mxu0
    %297 = vdwg.mxu0
    %v298 = vadd.f32 %v167, %v295
    %v299 = vxor.u32 %v298, 2147483648
    %v300 = vmul.f32 %v299, 1.442695
    %v301 = vpow.pop %v300
    %v302 = vadd.f32 %v301, 1.0
    %v303 = vrcp.pop %v302
    %v304 = vmul.f32 1.0, %v303
    %v305 = vtanh.pop %v298
    %v306 = vmul.f32 %v304, 0.0
    %308 = vrot.lane.b32.xlu0 %v305, 64
    %v309 = vpop.permute.xlu0 %308
    %v311 = vmul.f32 %v304, %v309
    %313 = vrot.lane.b32.xlu0 %v311, 32
    %v314 = vpop.permute.xlu0 %313
    %v316 = vadd.f32 %v306, %v314
    %v317 = vtanh.pop %v316
    %319 = vrot.lane.b32.xlu0 %v317, 64
    %v320 = vpop.permute.xlu0 %319
    %v322 = vmul.f32 %v304, %v320
    %323 = vmatprep.subr.mxu0 0.0
    %324 = vmatpush1.msra.mxu0 %v213
    %325 = vmatprep.subr.mxu0 0.0
    %326 = vmatpush1.msra.mxu0 %v214
    %327 = vmatprep.subr.mxu0 0.0
    %328 = vmatpush1.msra.mxu0 %v215
    %329 = vmatprep.subr.mxu0 0.0
    %330 = vmatpush1.msra.mxu0 %v216
    %331 = vmatprep.subr.mxu0 0.0
    %332 = vmatpush1.msra.mxu0 0.0
    %333 = vmatprep.subr.mxu0 0.0
    %334 = vmatpush1.msra.mxu0 0.0
    %335 = vmatprep.subr.mxu0 0.0
    %336 = vmatpush1.msra.mxu0 0.0
    %337 = vmatprep.subr.mxu0 0.0
    %338 = vmatpush1.msra.mxu0 0.0
    %339 = vmatprep.subr.mxu0 0.0
    %340 = vmatpush1.msra.mxu0 0.0
    %341 = vmatprep.subr.mxu0 0.0
    %342 = vmatpush1.msra.mxu0 0.0
    %343 = vmatprep.subr.mxu0 0.0
    %344 = vmatpush1.msra.mxu0 0.0
    %345 = vmatprep.subr.mxu0 0.0
    %346 = vmatpush1.msra.mxu0 0.0
    %347 = vmatprep.subr.mxu0 0.0
    %348 = vmatpush1.msra.mxu0 0.0
    %349 = vmatprep.subr.mxu0 0.0
    %350 = vmatpush1.msra.mxu0 0.0
    %351 = vmatprep.subr.mxu0 0.0
    %352 = vmatpush1.msra.mxu0 0.0
    %353 = vmatprep.subr.mxu0 0.0
    %354 = vmatpush1.msra.mxu0 0.0
    %355 = vmatprep.subr.mxu0 0.0
    %356 = vmatpush1.msra.mxu0 0.0
    %357 = vmatprep.subr.mxu0 0.0
    %358 = vmatpush1.msra.mxu0 0.0
    %359 = vmatprep.subr.mxu0 0.0
    %360 = vmatpush1.msra.mxu0 0.0
    %361 = vmatprep.subr.mxu0 0.0
    %362 = vmatpush1.msra.mxu0 0.0
    %363 = vmatprep.subr.mxu0 0.0
    %364 = vmatpush1.msra.mxu0 0.0
    %365 = vmatprep.subr.mxu0 0.0
    %366 = vmatpush1.msra.mxu0 0.0
    %367 = vmatprep.subr.mxu0 0.0
    %368 = vmatpush1.msra.mxu0 0.0
    %369 = vmatprep.subr.mxu0 0.0
    %370 = vmatpush1.msra.mxu0 0.0
    %371 = vmatprep.subr.mxu0 0.0
    %372 = vmatpush1.msra.mxu0 0.0
    %373 = vmatprep.subr.mxu0 0.0
    %374 = vmatpush1.msra.mxu0 0.0
    %375 = vmatprep.subr.mxu0 0.0
    %376 = vmatpush1.msra.mxu0 0.0
    %377 = vmatprep.subr.mxu0 0.0
    %378 = vmatpush1.msra.mxu0 0.0
    %379 = vmatprep.subr.mxu0 0.0
    %380 = vmatpush1.msra.mxu0 0.0
    %381 = vmatprep.subr.mxu0 0.0
    %382 = vmatpush1.msra.mxu0 0.0
    %383 = vmatprep.subr.mxu0 0.0
    %384 = vmatpush1.msra.mxu0 0.0
    %385 = vmatprep.subr.mxu0 0.0
    %386 = vmatpush1.msra.mxu0 0.0
    %387 = vmatprep.mubr.f32.mxu0 0.0
    %388 = vmatmul.mubr.f32.gmra.mrb[0].mxu0 %v226
    %v389 = vpop.f32.mrb[0].mxu0
    %v390 = vadd.f32 0.0, %v389
    %v391 = vpop.f32.mrb[0].mxu0
    %392 = vdwg.mxu0
    %394 = vrot.lane.b32.xlu0 %v322, 32
    %v395 = vpop.permute.xlu0 %394
    %v396 = vsel %vm224, %v395, 0
    %398 = vmatprep.subr.mxu0 0.0
    %399 = vmatpush1.msra.mxu0 %v209
    %400 = vmatprep.subr.mxu0 0.0
    %401 = vmatpush1.msra.mxu0 %v210
    %402 = vmatprep.subr.mxu0 0.0
    %403 = vmatpush1.msra.mxu0 %v211
    %404 = vmatprep.subr.mxu0 0.0
    %405 = vmatpush1.msra.mxu0 %v212
    %406 = vmatprep.subr.mxu0 0.0
    %407 = vmatpush1.msra.mxu0 0.0
    %408 = vmatprep.subr.mxu0 0.0
    %409 = vmatpush1.msra.mxu0 0.0
    %410 = vmatprep.subr.mxu0 0.0
    %411 = vmatpush1.msra.mxu0 0.0
    %412 = vmatprep.subr.mxu0 0.0
    %413 = vmatpush1.msra.mxu0 0.0
    %414 = vmatprep.subr.mxu0 0.0
    %415 = vmatpush1.msra.mxu0 0.0
    %416 = vmatprep.subr.mxu0 0.0
    %417 = vmatpush1.msra.mxu0 0.0
    %418 = vmatprep.subr.mxu0 0.0
    %419 = vmatpush1.msra.mxu0 0.0
    %420 = vmatprep.subr.mxu0 0.0
    %421 = vmatpush1.msra.mxu0 0.0
    %422 = vmatprep.subr.mxu0 0.0
    %423 = vmatpush1.msra.mxu0 0.0
    %424 = vmatprep.subr.mxu0 0.0
    %425 = vmatpush1.msra.mxu0 0.0
    %426 = vmatprep.subr.mxu0 0.0
    %427 = vmatpush1.msra.mxu0 0.0
    %428 = vmatprep.subr.mxu0 0.0
    %429 = vmatpush1.msra.mxu0 0.0
    %430 = vmatprep.subr.mxu0 0.0
    %431 = vmatpush1.msra.mxu0 0.0
    %432 = vmatprep.subr.mxu0 0.0
    %433 = vmatpush1.msra.mxu0 0.0
    %434 = vmatprep.subr.mxu0 0.0
    %435 = vmatpush1.msra.mxu0 0.0
    %436 = vmatprep.subr.mxu0 0.0
    %437 = vmatpush1.msra.mxu0 0.0
    %438 = vmatprep.subr.mxu0 0.0
    %439 = vmatpush1.msra.mxu0 0.0
    %440 = vmatprep.subr.mxu0 0.0
    %441 = vmatpush1.msra.mxu0 0.0
    %442 = vmatprep.subr.mxu0 0.0
    %443 = vmatpush1.msra.mxu0 0.0
    %444 = vmatprep.subr.mxu0 0.0
    %445 = vmatpush1.msra.mxu0 0.0
    %446 = vmatprep.subr.mxu0 0.0
    %447 = vmatpush1.msra.mxu0 0.0
    %448 = vmatprep.subr.mxu0 0.0
    %449 = vmatpush1.msra.mxu0 0.0
    %450 = vmatprep.subr.mxu0 0.0
    %451 = vmatpush1.msra.mxu0 0.0
    %452 = vmatprep.subr.mxu0 0.0
    %453 = vmatpush1.msra.mxu0 0.0
    %454 = vmatprep.subr.mxu0 0.0
    %455 = vmatpush1.msra.mxu0 0.0
    %456 = vmatprep.subr.mxu0 0.0
    %457 = vmatpush1.msra.mxu0 0.0
    %458 = vmatprep.subr.mxu0 0.0
    %459 = vmatpush1.msra.mxu0 0.0
    %460 = vmatprep.subr.mxu0 0.0
    %461 = vmatpush1.msra.mxu0 0.0
    %462 = vmatprep.mubr.f32.mxu0 0.0
    %463 = vmatmul.mubr.f32.gmra.mrb[0].mxu0 %v396
    %v464 = vpop.f32.mrb[0].mxu0
    %v465 = vadd.f32 %v390, %v464
    %v466 = vpop.f32.mrb[0].mxu0
    %467 = vdwg.mxu0
    %v468 = vadd.f32 %v465, %v222
    %v469 = vxor.u32 %v468, 2147483648
    %v470 = vmul.f32 %v469, 1.442695
    %v471 = vpow.pop %v470
    %v472 = vadd.f32 %v471, 1.0
    %v473 = vrcp.pop %v472
    %v474 = vmul.f32 1.0, %v473
    %v475 = vtanh.pop %v468
    %v476 = vmul.f32 %v474, 0.0
    %478 = vrot.lane.b32.xlu0 %v475, 64
    %v479 = vpop.permute.xlu0 %478
    %v481 = vmul.f32 %v474, %v479
    %483 = vrot.lane.b32.xlu0 %v481, 32
    %v484 = vpop.permute.xlu0 %483
    %v486 = vadd.f32 %v476, %v484
    %v487 = vtanh.pop %v486
    %489 = vrot.lane.b32.xlu0 %v487, 64
    %v490 = vpop.permute.xlu0 %489
    %v492 = vmul.f32 %v474, %v490
    %493 = vmatprep.subr.mxu0 0.0
    %494 = vmatpush1.msra.mxu0 %v205
    %495 = vmatprep.subr.mxu0 0.0
    %496 = vmatpush1.msra.mxu0 %v206
    %497 = vmatprep.subr.mxu0 0.0
    %498 = vmatpush1.msra.mxu0 %v207
    %499 = vmatprep.subr.mxu0 0.0
    %500 = vmatpush1.msra.mxu0 %v208
    %501 = vmatprep.subr.mxu0 0.0
    %502 = vmatpush1.msra.mxu0 0.0
    %503 = vmatprep.subr.mxu0 0.0
    %504 = vmatpush1.msra.mxu0 0.0
    %505 = vmatprep.subr.mxu0 0.0
    %506 = vmatpush1.msra.mxu0 0.0
    %507 = vmatprep.subr.mxu0 0.0
    %508 = vmatpush1.msra.mxu0 0.0
    %509 = vmatprep.subr.mxu0 0.0
    %510 = vmatpush1.msra.mxu0 0.0
    %511 = vmatprep.subr.mxu0 0.0
    %512 = vmatpush1.msra.mxu0 0.0
    %513 = vmatprep.subr.mxu0 0.0
    %514 = vmatpush1.msra.mxu0 0.0
    %515 = vmatprep.subr.mxu0 0.0
    %516 = vmatpush1.msra.mxu0 0.0
    %517 = vmatprep.subr.mxu0 0.0
    %518 = vmatpush1.msra.mxu0 0.0
    %519 = vmatprep.subr.mxu0 0.0
    %520 = vmatpush1.msra.mxu0 0.0
    %521 = vmatprep.subr.mxu0 0.0
    %522 = vmatpush1.msra.mxu0 0.0
    %523 = vmatprep.subr.mxu0 0.0
    %524 = vmatpush1.msra.mxu0 0.0
    %525 = vmatprep.subr.mxu0 0.0
    %526 = vmatpush1.msra.mxu0 0.0
    %527 = vmatprep.subr.mxu0 0.0
    %528 = vmatpush1.msra.mxu0 0.0
    %529 = vmatprep.subr.mxu0 0.0
    %530 = vmatpush1.msra.mxu0 0.0
    %531 = vmatprep.subr.mxu0 0.0
    %532 = vmatpush1.msra.mxu0 0.0
    %533 = vmatprep.subr.mxu0 0.0
    %534 = vmatpush1.msra.mxu0 0.0
    %535 = vmatprep.subr.mxu0 0.0
    %536 = vmatpush1.msra.mxu0 0.0
    %537 = vmatprep.subr.mxu0 0.0
    %538 = vmatpush1.msra.mxu0 0.0
    %539 = vmatprep.subr.mxu0 0.0
    %540 = vmatpush1.msra.mxu0 0.0
    %541 = vmatprep.subr.mxu0 0.0
    %542 = vmatpush1.msra.mxu0 0.0
    %543 = vmatprep.subr.mxu0 0.0
    %544 = vmatpush1.msra.mxu0 0.0
    %545 = vmatprep.subr.mxu0 0.0
    %546 = vmatpush1.msra.mxu0 0.0
    %547 = vmatprep.subr.mxu0 0.0
    %548 = vmatpush1.msra.mxu0 0.0
    %549 = vmatprep.subr.mxu0 0.0
    %550 = vmatpush1.msra.mxu0 0.0
    %551 = vmatprep.subr.mxu0 0.0
    %552 = vmatpush1.msra.mxu0 0.0
    %553 = vmatprep.subr.mxu0 0.0
    %554 = vmatpush1.msra.mxu0 0.0
    %555 = vmatprep.subr.mxu0 0.0
    %556 = vmatpush1.msra.mxu0 0.0
    %557 = vmatprep.mubr.f32.mxu0 0.0
    %558 = vmatmul.mubr.f32.gmra.mrb[0].mxu0 %v396
    %v559 = vpop.f32.mrb[0].mxu0
    %v560 = vadd.f32 0.0, %v559
    %v561 = vpop.f32.mrb[0].mxu0
    %562 = vdwg.mxu0
    %v563 = vadd.f32 %v172, %v560
    %v564 = vxor.u32 %v563, 2147483648
    %v565 = vmul.f32 %v564, 1.442695
    %v566 = vpow.pop %v565
    %v567 = vadd.f32 %v566, 1.0
    %v568 = vrcp.pop %v567
    %v569 = vmul.f32 1.0, %v568
    %v570 = vtanh.pop %v563
    %v571 = vmul.f32 %v569, %v316
    %573 = vrot.lane.b32.xlu0 %v570, 64
    %v574 = vpop.permute.xlu0 %573
    %v576 = vmul.f32 %v569, %v574
    %578 = vrot.lane.b32.xlu0 %v576, 32
    %v579 = vpop.permute.xlu0 %578
    %v581 = vadd.f32 %v571, %v579
    %v582 = vtanh.pop %v581
    %584 = vrot.lane.b32.xlu0 %v582, 64
    %v585 = vpop.permute.xlu0 %584
    %v587 = vmul.f32 %v569, %v585
    %589 = vrot.lane.b32.xlu0 %v492, 32
    %v590 = vpop.permute.xlu0 %589
    %v591 = vsel %vm224, %v590, 0
    %593 = vmatprep.subr.mxu0 0.0
    %594 = vmatpush1.msra.mxu0 %v213
    %595 = vmatprep.subr.mxu0 0.0
    %596 = vmatpush1.msra.mxu0 %v214
    %597 = vmatprep.subr.mxu0 0.0
    %598 = vmatpush1.msra.mxu0 %v215
    %599 = vmatprep.subr.mxu0 0.0
    %600 = vmatpush1.msra.mxu0 %v216
    %601 = vmatprep.subr.mxu0 0.0
    %602 = vmatpush1.msra.mxu0 0.0
    %603 = vmatprep.subr.mxu0 0.0
    %604 = vmatpush1.msra.mxu0 0.0
    %605 = vmatprep.subr.mxu0 0.0
    %606 = vmatpush1.msra.mxu0 0.0
    %607 = vmatprep.subr.mxu0 0.0
    %608 = vmatpush1.msra.mxu0 0.0
    %609 = vmatprep.subr.mxu0 0.0
    %610 = vmatpush1.msra.mxu0 0.0
    %611 = vmatprep.subr.mxu0 0.0
    %612 = vmatpush1.msra.mxu0 0.0
    %613 = vmatprep.subr.mxu0 0.0
    %614 = vmatpush1.msra.mxu0 0.0
    %615 = vmatprep.subr.mxu0 0.0
    %616 = vmatpush1.msra.mxu0 0.0
    %617 = vmatprep.subr.mxu0 0.0
    %618 = vmatpush1.msra.mxu0 0.0
    %619 = vmatprep.subr.mxu0 0.0
    %620 = vmatpush1.msra.mxu0 0.0
    %621 = vmatprep.subr.mxu0 0.0
    %622 = vmatpush1.msra.mxu0 0.0
    %623 = vmatprep.subr.mxu0 0.0
    %624 = vmatpush1.msra.mxu0 0.0
    %625 = vmatprep.subr.mxu0 0.0
    %626 = vmatpush1.msra.mxu0 0.0
    %627 = vmatprep.subr.mxu0 0.0
    %628 = vmatpush1.msra.mxu0 0.0
    %629 = vmatprep.subr.mxu0 0.0
    %630 = vmatpush1.msra.mxu0 0.0
    %631 = vmatprep.subr.mxu0 0.0
    %632 = vmatpush1.msra.mxu0 0.0
    %633 = vmatprep.subr.mxu0 0.0
    %634 = vmatpush1.msra.mxu0 0.0
    %635 = vmatprep.subr.mxu0 0.0
    %636 = vmatpush1.msra.mxu0 0.0
    %637 = vmatprep.subr.mxu0 0.0
    %638 = vmatpush1.msra.mxu0 0.0
    %639 = vmatprep.subr.mxu0 0.0
    %640 = vmatpush1.msra.mxu0 0.0
    %641 = vmatprep.subr.mxu0 0.0
    %642 = vmatpush1.msra.mxu0 0.0
    %643 = vmatprep.subr.mxu0 0.0
    %644 = vmatpush1.msra.mxu0 0.0
    %645 = vmatprep.subr.mxu0 0.0
    %646 = vmatpush1.msra.mxu0 0.0
    %647 = vmatprep.subr.mxu0 0.0
    %648 = vmatpush1.msra.mxu0 0.0
    %649 = vmatprep.subr.mxu0 0.0
    %650 = vmatpush1.msra.mxu0 0.0
    %651 = vmatprep.subr.mxu0 0.0
    %652 = vmatpush1.msra.mxu0 0.0
    %653 = vmatprep.subr.mxu0 0.0
    %654 = vmatpush1.msra.mxu0 0.0
    %655 = vmatprep.subr.mxu0 0.0
    %656 = vmatpush1.msra.mxu0 0.0
    %657 = vmatprep.mubr.f32.mxu0 0.0
    %658 = vmatmul.mubr.f32.gmra.mrb[0].mxu0 %v591
    %v659 = vpop.f32.mrb[0].mxu0
    %v660 = vadd.f32 0.0, %v659
    %v661 = vpop.f32.mrb[0].mxu0
    %662 = vdwg.mxu0
    %664 = vrot.lane.b32.xlu0 %v587, 32
    %v665 = vpop.permute.xlu0 %664
    %v666 = vsel %vm224, %v665, 0
    %668 = vmatprep.subr.mxu0 0.0
    %669 = vmatpush1.msra.mxu0 %v209
    %670 = vmatprep.subr.mxu0 0.0
    %671 = vmatpush1.msra.mxu0 %v210
    %672 = vmatprep.subr.mxu0 0.0
    %673 = vmatpush1.msra.mxu0 %v211
    %674 = vmatprep.subr.mxu0 0.0
    %675 = vmatpush1.msra.mxu0 %v212
    %676 = vmatprep.subr.mxu0 0.0
    %677 = vmatpush1.msra.mxu0 0.0
    %678 = vmatprep.subr.mxu0 0.0
    %679 = vmatpush1.msra.mxu0 0.0
    %680 = vmatprep.subr.mxu0 0.0
    %681 = vmatpush1.msra.mxu0 0.0
    %682 = vmatprep.subr.mxu0 0.0
    %683 = vmatpush1.msra.mxu0 0.0
    %684 = vmatprep.subr.mxu0 0.0
    %685 = vmatpush1.msra.mxu0 0.0
    %686 = vmatprep.subr.mxu0 0.0
    %687 = vmatpush1.msra.mxu0 0.0
    %688 = vmatprep.subr.mxu0 0.0
    %689 = vmatpush1.msra.mxu0 0.0
    %690 = vmatprep.subr.mxu0 0.0
    %691 = vmatpush1.msra.mxu0 0.0
    %692 = vmatprep.subr.mxu0 0.0
    %693 = vmatpush1.msra.mxu0 0.0
    %694 = vmatprep.subr.mxu0 0.0
    %695 = vmatpush1.msra.mxu0 0.0
    %696 = vmatprep.subr.mxu0 0.0
    %697 = vmatpush1.msra.mxu0 0.0
    %698 = vmatprep.subr.mxu0 0.0
    %699 = vmatpush1.msra.mxu0 0.0
    %700 = vmatprep.subr.mxu0 0.0
    %701 = vmatpush1.msra.mxu0 0.0
    %702 = vmatprep.subr.mxu0 0.0
    %703 = vmatpush1.msra.mxu0 0.0
    %704 = vmatprep.subr.mxu0 0.0
    %705 = vmatpush1.msra.mxu0 0.0
    %706 = vmatprep.subr.mxu0 0.0
    %707 = vmatpush1.msra.mxu0 0.0
    %708 = vmatprep.subr.mxu0 0.0
    %709 = vmatpush1.msra.mxu0 0.0
    %710 = vmatprep.subr.mxu0 0.0
    %711 = vmatpush1.msra.mxu0 0.0
    %712 = vmatprep.subr.mxu0 0.0
    %713 = vmatpush1.msra.mxu0 0.0
    %714 = vmatprep.subr.mxu0 0.0
    %715 = vmatpush1.msra.mxu0 0.0
    %716 = vmatprep.subr.mxu0 0.0
    %717 = vmatpush1.msra.mxu0 0.0
    %718 = vmatprep.subr.mxu0 0.0
    %719 = vmatpush1.msra.mxu0 0.0
    %720 = vmatprep.subr.mxu0 0.0
    %721 = vmatpush1.msra.mxu0 0.0
    %722 = vmatprep.subr.mxu0 0.0
    %723 = vmatpush1.msra.mxu0 0.0
    %724 = vmatprep.subr.mxu0 0.0
    %725 = vmatpush1.msra.mxu0 0.0
    %726 = vmatprep.subr.mxu0 0.0
    %727 = vmatpush1.msra.mxu0 0.0
    %728 = vmatprep.subr.mxu0 0.0
    %729 = vmatpush1.msra.mxu0 0.0
    %730 = vmatprep.subr.mxu0 0.0
    %731 = vmatpush1.msra.mxu0 0.0
    %732 = vmatprep.mubr.f32.mxu0 0.0
    %733 = vmatmul.mubr.f32.gmra.mrb[0].mxu0 %v666
    %v734 = vpop.f32.mrb[0].mxu0
    %v735 = vadd.f32 %v660, %v734
    %v736 = vpop.f32.mrb[0].mxu0
    %737 = vdwg.mxu0
    %v738 = vadd.f32 %v735, %v222
    %v739 = vxor.u32 %v738, 2147483648
    %v740 = vmul.f32 %v739, 1.442695
    %v741 = vpow.pop %v740
    %v742 = vadd.f32 %v741, 1.0
    %v743 = vrcp.pop %v742
    %v744 = vmul.f32 1.0, %v743
    %v745 = vtanh.pop %v738
    %v746 = vmul.f32 %v744, %v486
    %748 = vrot.lane.b32.xlu0 %v745, 64
    %v749 = vpop.permute.xlu0 %748
    %v751 = vmul.f32 %v744, %v749
    %753 = vrot.lane.b32.xlu0 %v751, 32
    %v754 = vpop.permute.xlu0 %753
    %v756 = vadd.f32 %v746, %v754
    %v757 = vtanh.pop %v756
    %759 = vrot.lane.b32.xlu0 %v757, 64
    %v760 = vpop.permute.xlu0 %759
    %v762 = vmul.f32 %v744, %v760
    %763 = vmatprep.subr.mxu0 0.0
    %764 = vmatpush1.msra.mxu0 %v205
    %765 = vmatprep.subr.mxu0 0.0
    %766 = vmatpush1.msra.mxu0 %v206
    %767 = vmatprep.subr.mxu0 0.0
    %768 = vmatpush1.msra.mxu0 %v207
    %769 = vmatprep.subr.mxu0 0.0
    %770 = vmatpush1.msra.mxu0 %v208
    %771 = vmatprep.subr.mxu0 0.0
    %772 = vmatpush1.msra.mxu0 0.0
    %773 = vmatprep.subr.mxu0 0.0
    %774 = vmatpush1.msra.mxu0 0.0
    %775 = vmatprep.subr.mxu0 0.0
    %776 = vmatpush1.msra.mxu0 0.0
    %777 = vmatprep.subr.mxu0 0.0
    %778 = vmatpush1.msra.mxu0 0.0
    %779 = vmatprep.subr.mxu0 0.0
    %780 = vmatpush1.msra.mxu0 0.0
    %781 = vmatprep.subr.mxu0 0.0
    %782 = vmatpush1.msra.mxu0 0.0
    %783 = vmatprep.subr.mxu0 0.0
    %784 = vmatpush1.msra.mxu0 0.0
    %785 = vmatprep.subr.mxu0 0.0
    %786 = vmatpush1.msra.mxu0 0.0
    %787 = vmatprep.subr.mxu0 0.0
    %788 = vmatpush1.msra.mxu0 0.0
    %789 = vmatprep.subr.mxu0 0.0
    %790 = vmatpush1.msra.mxu0 0.0
    %791 = vmatprep.subr.mxu0 0.0
    %792 = vmatpush1.msra.mxu0 0.0
    %793 = vmatprep.subr.mxu0 0.0
    %794 = vmatpush1.msra.mxu0 0.0
    %795 = vmatprep.subr.mxu0 0.0
    %796 = vmatpush1.msra.mxu0 0.0
    %797 = vmatprep.subr.mxu0 0.0
    %798 = vmatpush1.msra.mxu0 0.0
    %799 = vmatprep.subr.mxu0 0.0
    %800 = vmatpush1.msra.mxu0 0.0
    %801 = vmatprep.subr.mxu0 0.0
    %802 = vmatpush1.msra.mxu0 0.0
    %803 = vmatprep.subr.mxu0 0.0
    %804 = vmatpush1.msra.mxu0 0.0
    %805 = vmatprep.subr.mxu0 0.0
    %806 = vmatpush1.msra.mxu0 0.0
    %807 = vmatprep.subr.mxu0 0.0
    %808 = vmatpush1.msra.mxu0 0.0
    %809 = vmatprep.subr.mxu0 0.0
    %810 = vmatpush1.msra.mxu0 0.0
    %811 = vmatprep.subr.mxu0 0.0
    %812 = vmatpush1.msra.mxu0 0.0
    %813 = vmatprep.subr.mxu0 0.0
    %814 = vmatpush1.msra.mxu0 0.0
    %815 = vmatprep.subr.mxu0 0.0
    %816 = vmatpush1.msra.mxu0 0.0
    %817 = vmatprep.subr.mxu0 0.0
    %818 = vmatpush1.msra.mxu0 0.0
    %819 = vmatprep.subr.mxu0 0.0
    %820 = vmatpush1.msra.mxu0 0.0
    %821 = vmatprep.subr.mxu0 0.0
    %822 = vmatpush1.msra.mxu0 0.0
    %823 = vmatprep.subr.mxu0 0.0
    %824 = vmatpush1.msra.mxu0 0.0
    %825 = vmatprep.subr.mxu0 0.0
    %826 = vmatpush1.msra.mxu0 0.0
    %827 = vmatprep.mubr.f32.mxu0 0.0
    %828 = vmatmul.mubr.f32.gmra.mrb[0].mxu0 %v666
    %v829 = vpop.f32.mrb[0].mxu0
    %v830 = vadd.f32 0.0, %v829
    %v831 = vpop.f32.mrb[0].mxu0
    %832 = vdwg.mxu0
    %v833 = vadd.f32 %v177, %v830
    %v834 = vxor.u32 %v833, 2147483648
    %v835 = vmul.f32 %v834, 1.442695
    %v836 = vpow.pop %v835
    %v837 = vadd.f32 %v836, 1.0
    %v838 = vrcp.pop %v837
    %v839 = vmul.f32 1.0, %v838
    %v840 = vtanh.pop %v833
    %v841 = vmul.f32 %v839, %v581
    %843 = vrot.lane.b32.xlu0 %v840, 64
    %v844 = vpop.permute.xlu0 %843
    %v846 = vmul.f32 %v839, %v844
    %848 = vrot.lane.b32.xlu0 %v846, 32
    %v849 = vpop.permute.xlu0 %848
    %v851 = vadd.f32 %v841, %v849
    %v852 = vtanh.pop %v851
    %854 = vrot.lane.b32.xlu0 %v852, 64
    %v855 = vpop.permute.xlu0 %854
    %v857 = vmul.f32 %v839, %v855
    %859 = vrot.lane.b32.xlu0 %v762, 32
    %v860 = vpop.permute.xlu0 %859
    %v861 = vsel %vm224, %v860, 0
    %863 = vmatprep.subr.mxu0 0.0
    %864 = vmatpush1.msra.mxu0 %v213
    %865 = vmatprep.subr.mxu0 0.0
    %866 = vmatpush1.msra.mxu0 %v214
    %867 = vmatprep.subr.mxu0 0.0
    %868 = vmatpush1.msra.mxu0 %v215
    %869 = vmatprep.subr.mxu0 0.0
    %870 = vmatpush1.msra.mxu0 %v216
    %871 = vmatprep.subr.mxu0 0.0
    %872 = vmatpush1.msra.mxu0 0.0
    %873 = vmatprep.subr.mxu0 0.0
    %874 = vmatpush1.msra.mxu0 0.0
    %875 = vmatprep.subr.mxu0 0.0
    %876 = vmatpush1.msra.mxu0 0.0
    %877 = vmatprep.subr.mxu0 0.0
    %878 = vmatpush1.msra.mxu0 0.0
    %879 = vmatprep.subr.mxu0 0.0
    %880 = vmatpush1.msra.mxu0 0.0
    %881 = vmatprep.subr.mxu0 0.0
    %882 = vmatpush1.msra.mxu0 0.0
    %883 = vmatprep.subr.mxu0 0.0
    %884 = vmatpush1.msra.mxu0 0.0
    %885 = vmatprep.subr.mxu0 0.0
    %886 = vmatpush1.msra.mxu0 0.0
    %887 = vmatprep.subr.mxu0 0.0
    %888 = vmatpush1.msra.mxu0 0.0
    %889 = vmatprep.subr.mxu0 0.0
    %890 = vmatpush1.msra.mxu0 0.0
    %891 = vmatprep.subr.mxu0 0.0
    %892 = vmatpush1.msra.mxu0 0.0
    %893 = vmatprep.subr.mxu0 0.0
    %894 = vmatpush1.msra.mxu0 0.0
    %895 = vmatprep.subr.mxu0 0.0
    %896 = vmatpush1.msra.mxu0 0.0
    %897 = vmatprep.subr.mxu0 0.0
    %898 = vmatpush1.msra.mxu0 0.0
    %899 = vmatprep.subr.mxu0 0.0
    %900 = vmatpush1.msra.mxu0 0.0
    %901 = vmatprep.subr.mxu0 0.0
    %902 = vmatpush1.msra.mxu0 0.0
    %903 = vmatprep.subr.mxu0 0.0
    %904 = vmatpush1.msra.mxu0 0.0
    %905 = vmatprep.subr.mxu0 0.0
    %906 = vmatpush1.msra.mxu0 0.0
    %907 = vmatprep.subr.mxu0 0.0
    %908 = vmatpush1.msra.mxu0 0.0
    %909 = vmatprep.subr.mxu0 0.0
    %910 = vmatpush1.msra.mxu0 0.0
    %911 = vmatprep.subr.mxu0 0.0
    %912 = vmatpush1.msra.mxu0 0.0
    %913 = vmatprep.subr.mxu0 0.0
    %914 = vmatpush1.msra.mxu0 0.0
    %915 = vmatprep.subr.mxu0 0.0
    %916 = vmatpush1.msra.mxu0 0.0
    %917 = vmatprep.subr.mxu0 0.0
    %918 = vmatpush1.msra.mxu0 0.0
    %919 = vmatprep.subr.mxu0 0.0
    %920 = vmatpush1.msra.mxu0 0.0
    %921 = vmatprep.subr.mxu0 0.0
    %922 = vmatpush1.msra.mxu0 0.0
    %923 = vmatprep.subr.mxu0 0.0
    %924 = vmatpush1.msra.mxu0 0.0
    %925 = vmatprep.subr.mxu0 0.0
    %926 = vmatpush1.msra.mxu0 0.0
    %927 = vmatprep.mubr.f32.mxu0 0.0
    %928 = vmatmul.mubr.f32.gmra.mrb[0].mxu0 %v861
    %v929 = vpop.f32.mrb[0].mxu0
    %v930 = vadd.f32 0.0, %v929
    %v931 = vpop.f32.mrb[0].mxu0
    %932 = vdwg.mxu0
    %934 = vrot.lane.b32.xlu0 %v857, 32
    %v935 = vpop.permute.xlu0 %934
    %v936 = vsel %vm224, %v935, 0
    %938 = vmatprep.subr.mxu0 0.0
    %939 = vmatpush1.msra.mxu0 %v209
    %940 = vmatprep.subr.mxu0 0.0
    %941 = vmatpush1.msra.mxu0 %v210
    %942 = vmatprep.subr.mxu0 0.0
    %943 = vmatpush1.msra.mxu0 %v211
    %944 = vmatprep.subr.mxu0 0.0
    %945 = vmatpush1.msra.mxu0 %v212
    %946 = vmatprep.subr.mxu0 0.0
    %947 = vmatpush1.msra.mxu0 0.0
    %948 = vmatprep.subr.mxu0 0.0
    %949 = vmatpush1.msra.mxu0 0.0
    %950 = vmatprep.subr.mxu0 0.0
    %951 = vmatpush1.msra.mxu0 0.0
    %952 = vmatprep.subr.mxu0 0.0
    %953 = vmatpush1.msra.mxu0 0.0
    %954 = vmatprep.subr.mxu0 0.0
    %955 = vmatpush1.msra.mxu0 0.0
    %956 = vmatprep.subr.mxu0 0.0
    %957 = vmatpush1.msra.mxu0 0.0
    %958 = vmatprep.subr.mxu0 0.0
    %959 = vmatpush1.msra.mxu0 0.0
    %960 = vmatprep.subr.mxu0 0.0
    %961 = vmatpush1.msra.mxu0 0.0
    %962 = vmatprep.subr.mxu0 0.0
    %963 = vmatpush1.msra.mxu0 0.0
    %964 = vmatprep.subr.mxu0 0.0
    %965 = vmatpush1.msra.mxu0 0.0
    %966 = vmatprep.subr.mxu0 0.0
    %967 = vmatpush1.msra.mxu0 0.0
    %968 = vmatprep.subr.mxu0 0.0
    %969 = vmatpush1.msra.mxu0 0.0
    %970 = vmatprep.subr.mxu0 0.0
    %971 = vmatpush1.msra.mxu0 0.0
    %972 = vmatprep.subr.mxu0 0.0
    %973 = vmatpush1.msra.mxu0 0.0
    %974 = vmatprep.subr.mxu0 0.0
    %975 = vmatpush1.msra.mxu0 0.0
    %976 = vmatprep.subr.mxu0 0.0
    %977 = vmatpush1.msra.mxu0 0.0
    %978 = vmatprep.subr.mxu0 0.0
    %979 = vmatpush1.msra.mxu0 0.0
    %980 = vmatprep.subr.mxu0 0.0
    %981 = vmatpush1.msra.mxu0 0.0
    %982 = vmatprep.subr.mxu0 0.0
    %983 = vmatpush1.msra.mxu0 0.0
    %984 = vmatprep.subr.mxu0 0.0
    %985 = vmatpush1.msra.mxu0 0.0
    %986 = vmatprep.subr.mxu0 0.0
    %987 = vmatpush1.msra.mxu0 0.0
    %988 = vmatprep.subr.mxu0 0.0
    %989 = vmatpush1.msra.mxu0 0.0
    %990 = vmatprep.subr.mxu0 0.0
    %991 = vmatpush1.msra.mxu0 0.0
    %992 = vmatprep.subr.mxu0 0.0
    %993 = vmatpush1.msra.mxu0 0.0
    %994 = vmatprep.subr.mxu0 0.0
    %995 = vmatpush1.msra.mxu0 0.0
    %996 = vmatprep.subr.mxu0 0.0
    %997 = vmatpush1.msra.mxu0 0.0
    %998 = vmatprep.subr.mxu0 0.0
    %999 = vmatpush1.msra.mxu0 0.0
    %1000 = vmatprep.subr.mxu0 0.0
    %1001 = vmatpush1.msra.mxu0 0.0
    %1002 = vmatprep.mubr.f32.mxu0 0.0
    %1003 = vmatmul.mubr.f32.gmra.mrb[0].mxu0 %v936
    %v1004 = vpop.f32.mrb[0].mxu0
    %v1005 = vadd.f32 %v930, %v1004
    %v1006 = vpop.f32.mrb[0].mxu0
    %1007 = vdwg.mxu0
    %v1008 = vadd.f32 %v1005, %v222
    %v1009 = vxor.u32 %v1008, 2147483648
    %v1010 = vmul.f32 %v1009, 1.442695
    %v1011 = vpow.pop %v1010
    %v1012 = vadd.f32 %v1011, 1.0
    %v1013 = vrcp.pop %v1012
    %v1014 = vmul.f32 1.0, %v1013
    %v1015 = vtanh.pop %v1008
    %v1016 = vmul.f32 %v1014, %v756
    %1018 = vrot.lane.b32.xlu0 %v1015, 64
    %v1019 = vpop.permute.xlu0 %1018
    %v1021 = vmul.f32 %v1014, %v1019
    %1023 = vrot.lane.b32.xlu0 %v1021, 32
    %v1024 = vpop.permute.xlu0 %1023
    %v1026 = vadd.f32 %v1016, %v1024
    %v1027 = vtanh.pop %v1026
    %1029 = vrot.lane.b32.xlu0 %v1027, 64
    %v1030 = vpop.permute.xlu0 %1029
    %v1032 = vmul.f32 %v1014, %v1030
    %1033 = vmatprep.subr.mxu0 0.0
    %1034 = vmatpush1.msra.mxu0 %v205
    %1035 = vmatprep.subr.mxu0 0.0
    %1036 = vmatpush1.msra.mxu0 %v206
    %1037 = vmatprep.subr.mxu0 0.0
    %1038 = vmatpush1.msra.mxu0 %v207
    %1039 = vmatprep.subr.mxu0 0.0
    %1040 = vmatpush1.msra.mxu0 %v208
    %1041 = vmatprep.subr.mxu0 0.0
    %1042 = vmatpush1.msra.mxu0 0.0
    %1043 = vmatprep.subr.mxu0 0.0
    %1044 = vmatpush1.msra.mxu0 0.0
    %1045 = vmatprep.subr.mxu0 0.0
    %1046 = vmatpush1.msra.mxu0 0.0
    %1047 = vmatprep.subr.mxu0 0.0
    %1048 = vmatpush1.msra.mxu0 0.0
    %1049 = vmatprep.subr.mxu0 0.0
    %1050 = vmatpush1.msra.mxu0 0.0
    %1051 = vmatprep.subr.mxu0 0.0
    %1052 = vmatpush1.msra.mxu0 0.0
    %1053 = vmatprep.subr.mxu0 0.0
    %1054 = vmatpush1.msra.mxu0 0.0
    %1055 = vmatprep.subr.mxu0 0.0
    %1056 = vmatpush1.msra.mxu0 0.0
    %1057 = vmatprep.subr.mxu0 0.0
    %1058 = vmatpush1.msra.mxu0 0.0
    %1059 = vmatprep.subr.mxu0 0.0
    %1060 = vmatpush1.msra.mxu0 0.0
    %1061 = vmatprep.subr.mxu0 0.0
    %1062 = vmatpush1.msra.mxu0 0.0
    %1063 = vmatprep.subr.mxu0 0.0
    %1064 = vmatpush1.msra.mxu0 0.0
    %1065 = vmatprep.subr.mxu0 0.0
    %1066 = vmatpush1.msra.mxu0 0.0
    %1067 = vmatprep.subr.mxu0 0.0
    %1068 = vmatpush1.msra.mxu0 0.0
    %1069 = vmatprep.subr.mxu0 0.0
    %1070 = vmatpush1.msra.mxu0 0.0
    %1071 = vmatprep.subr.mxu0 0.0
    %1072 = vmatpush1.msra.mxu0 0.0
    %1073 = vmatprep.subr.mxu0 0.0
    %1074 = vmatpush1.msra.mxu0 0.0
    %1075 = vmatprep.subr.mxu0 0.0
    %1076 = vmatpush1.msra.mxu0 0.0
    %1077 = vmatprep.subr.mxu0 0.0
    %1078 = vmatpush1.msra.mxu0 0.0
    %1079 = vmatprep.subr.mxu0 0.0
    %1080 = vmatpush1.msra.mxu0 0.0
    %1081 = vmatprep.subr.mxu0 0.0
    %1082 = vmatpush1.msra.mxu0 0.0
    %1083 = vmatprep.subr.mxu0 0.0
    %1084 = vmatpush1.msra.mxu0 0.0
    %1085 = vmatprep.subr.mxu0 0.0
    %1086 = vmatpush1.msra.mxu0 0.0
    %1087 = vmatprep.subr.mxu0 0.0
    %1088 = vmatpush1.msra.mxu0 0.0
    %1089 = vmatprep.subr.mxu0 0.0
    %1090 = vmatpush1.msra.mxu0 0.0
    %1091 = vmatprep.subr.mxu0 0.0
    %1092 = vmatpush1.msra.mxu0 0.0
    %1093 = vmatprep.subr.mxu0 0.0
    %1094 = vmatpush1.msra.mxu0 0.0
    %1095 = vmatprep.subr.mxu0 0.0
    %1096 = vmatpush1.msra.mxu0 0.0
    %1097 = vmatprep.mubr.f32.mxu0 0.0
    %1098 = vmatmul.mubr.f32.gmra.mrb[0].mxu0 %v936
    %v1099 = vpop.f32.mrb[0].mxu0
    %v1100 = vadd.f32 0.0, %v1099
    %v1101 = vpop.f32.mrb[0].mxu0
    %1102 = vdwg.mxu0
    %v1103 = vadd.f32 %v182, %v1100
    %v1104 = vxor.u32 %v1103, 2147483648
    %v1105 = vmul.f32 %v1104, 1.442695
    %v1106 = vpow.pop %v1105
    %v1107 = vadd.f32 %v1106, 1.0
    %v1108 = vrcp.pop %v1107
    %v1109 = vmul.f32 1.0, %v1108
    %v1110 = vtanh.pop %v1103
    %v1111 = vmul.f32 %v1109, %v851
    %1113 = vrot.lane.b32.xlu0 %v1110, 64
    %v1114 = vpop.permute.xlu0 %1113
    %v1116 = vmul.f32 %v1109, %v1114
    %1118 = vrot.lane.b32.xlu0 %v1116, 32
    %v1119 = vpop.permute.xlu0 %1118
    %v1121 = vadd.f32 %v1111, %v1119
    %v1122 = vtanh.pop %v1121
    %1124 = vrot.lane.b32.xlu0 %v1122, 64
    %v1125 = vpop.permute.xlu0 %1124
    %v1127 = vmul.f32 %v1109, %v1125
    %1129 = vrot.lane.b32.xlu0 %v1032, 32
    %v1130 = vpop.permute.xlu0 %1129
    %v1131 = vsel %vm224, %v1130, 0
    %1133 = vmatprep.subr.mxu0 0.0
    %1134 = vmatpush1.msra.mxu0 %v213
    %1135 = vmatprep.subr.mxu0 0.0
    %1136 = vmatpush1.msra.mxu0 %v214
    %1137 = vmatprep.subr.mxu0 0.0
    %1138 = vmatpush1.msra.mxu0 %v215
    %1139 = vmatprep.subr.mxu0 0.0
    %1140 = vmatpush1.msra.mxu0 %v216
    %1141 = vmatprep.subr.mxu0 0.0
    %1142 = vmatpush1.msra.mxu0 0.0
    %1143 = vmatprep.subr.mxu0 0.0
    %1144 = vmatpush1.msra.mxu0 0.0
    %1145 = vmatprep.subr.mxu0 0.0
    %1146 = vmatpush1.msra.mxu0 0.0
    %1147 = vmatprep.subr.mxu0 0.0
    %1148 = vmatpush1.msra.mxu0 0.0
    %1149 = vmatprep.subr.mxu0 0.0
    %1150 = vmatpush1.msra.mxu0 0.0
    %1151 = vmatprep.subr.mxu0 0.0
    %1152 = vmatpush1.msra.mxu0 0.0
    %1153 = vmatprep.subr.mxu0 0.0
    %1154 = vmatpush1.msra.mxu0 0.0
    %1155 = vmatprep.subr.mxu0 0.0
    %1156 = vmatpush1.msra.mxu0 0.0
    %1157 = vmatprep.subr.mxu0 0.0
    %1158 = vmatpush1.msra.mxu0 0.0
    %1159 = vmatprep.subr.mxu0 0.0
    %1160 = vmatpush1.msra.mxu0 0.0
    %1161 = vmatprep.subr.mxu0 0.0
    %1162 = vmatpush1.msra.mxu0 0.0
    %1163 = vmatprep.subr.mxu0 0.0
    %1164 = vmatpush1.msra.mxu0 0.0
    %1165 = vmatprep.subr.mxu0 0.0
    %1166 = vmatpush1.msra.mxu0 0.0
    %1167 = vmatprep.subr.mxu0 0.0
    %1168 = vmatpush1.msra.mxu0 0.0
    %1169 = vmatprep.subr.mxu0 0.0
    %1170 = vmatpush1.msra.mxu0 0.0
    %1171 = vmatprep.subr.mxu0 0.0
    %1172 = vmatpush1.msra.mxu0 0.0
    %1173 = vmatprep.subr.mxu0 0.0
    %1174 = vmatpush1.msra.mxu0 0.0
    %1175 = vmatprep.subr.mxu0 0.0
    %1176 = vmatpush1.msra.mxu0 0.0
    %1177 = vmatprep.subr.mxu0 0.0
    %1178 = vmatpush1.msra.mxu0 0.0
    %1179 = vmatprep.subr.mxu0 0.0
    %1180 = vmatpush1.msra.mxu0 0.0
    %1181 = vmatprep.subr.mxu0 0.0
    %1182 = vmatpush1.msra.mxu0 0.0
    %1183 = vmatprep.subr.mxu0 0.0
    %1184 = vmatpush1.msra.mxu0 0.0
    %1185 = vmatprep.subr.mxu0 0.0
    %1186 = vmatpush1.msra.mxu0 0.0
    %1187 = vmatprep.subr.mxu0 0.0
    %1188 = vmatpush1.msra.mxu0 0.0
    %1189 = vmatprep.subr.mxu0 0.0
    %1190 = vmatpush1.msra.mxu0 0.0
    %1191 = vmatprep.subr.mxu0 0.0
    %1192 = vmatpush1.msra.mxu0 0.0
    %1193 = vmatprep.subr.mxu0 0.0
    %1194 = vmatpush1.msra.mxu0 0.0
    %1195 = vmatprep.subr.mxu0 0.0
    %1196 = vmatpush1.msra.mxu0 0.0
    %1197 = vmatprep.mubr.f32.mxu0 0.0
    %1198 = vmatmul.mubr.f32.gmra.mrb[0].mxu0 %v1131
    %v1199 = vpop.f32.mrb[0].mxu0
    %v1200 = vadd.f32 0.0, %v1199
    %v1201 = vpop.f32.mrb[0].mxu0
    %1202 = vdwg.mxu0
    %1204 = vrot.lane.b32.xlu0 %v1127, 32
    %v1205 = vpop.permute.xlu0 %1204
    %v1206 = vsel %vm224, %v1205, 0
    %1208 = vmatprep.subr.mxu0 0.0
    %1209 = vmatpush1.msra.mxu0 %v209
    %1210 = vmatprep.subr.mxu0 0.0
    %1211 = vmatpush1.msra.mxu0 %v210
    %1212 = vmatprep.subr.mxu0 0.0
    %1213 = vmatpush1.msra.mxu0 %v211
    %1214 = vmatprep.subr.mxu0 0.0
    %1215 = vmatpush1.msra.mxu0 %v212
    %1216 = vmatprep.subr.mxu0 0.0
    %1217 = vmatpush1.msra.mxu0 0.0
    %1218 = vmatprep.subr.mxu0 0.0
    %1219 = vmatpush1.msra.mxu0 0.0
    %1220 = vmatprep.subr.mxu0 0.0
    %1221 = vmatpush1.msra.mxu0 0.0
    %1222 = vmatprep.subr.mxu0 0.0
    %1223 = vmatpush1.msra.mxu0 0.0
    %1224 = vmatprep.subr.mxu0 0.0
    %1225 = vmatpush1.msra.mxu0 0.0
    %1226 = vmatprep.subr.mxu0 0.0
    %1227 = vmatpush1.msra.mxu0 0.0
    %1228 = vmatprep.subr.mxu0 0.0
    %1229 = vmatpush1.msra.mxu0 0.0
    %1230 = vmatprep.subr.mxu0 0.0
    %1231 = vmatpush1.msra.mxu0 0.0
    %1232 = vmatprep.subr.mxu0 0.0
    %1233 = vmatpush1.msra.mxu0 0.0
    %1234 = vmatprep.subr.mxu0 0.0
    %1235 = vmatpush1.msra.mxu0 0.0
    %1236 = vmatprep.subr.mxu0 0.0
    %1237 = vmatpush1.msra.mxu0 0.0
    %1238 = vmatprep.subr.mxu0 0.0
    %1239 = vmatpush1.msra.mxu0 0.0
    %1240 = vmatprep.subr.mxu0 0.0
    %1241 = vmatpush1.msra.mxu0 0.0
    %1242 = vmatprep.subr.mxu0 0.0
    %1243 = vmatpush1.msra.mxu0 0.0
    %1244 = vmatprep.subr.mxu0 0.0
    %1245 = vmatpush1.msra.mxu0 0.0
    %1246 = vmatprep.subr.mxu0 0.0
    %1247 = vmatpush1.msra.mxu0 0.0
    %1248 = vmatprep.subr.mxu0 0.0
    %1249 = vmatpush1.msra.mxu0 0.0
    %1250 = vmatprep.subr.mxu0 0.0
    %1251 = vmatpush1.msra.mxu0 0.0
    %1252 = vmatprep.subr.mxu0 0.0
    %1253 = vmatpush1.msra.mxu0 0.0
    %1254 = vmatprep.subr.mxu0 0.0
    %1255 = vmatpush1.msra.mxu0 0.0
    %1256 = vmatprep.subr.mxu0 0.0
    %1257 = vmatpush1.msra.mxu0 0.0
    %1258 = vmatprep.subr.mxu0 0.0
    %1259 = vmatpush1.msra.mxu0 0.0
    %1260 = vmatprep.subr.mxu0 0.0
    %1261 = vmatpush1.msra.mxu0 0.0
    %1262 = vmatprep.subr.mxu0 0.0
    %1263 = vmatpush1.msra.mxu0 0.0
    %1264 = vmatprep.subr.mxu0 0.0
    %1265 = vmatpush1.msra.mxu0 0.0
    %1266 = vmatprep.subr.mxu0 0.0
    %1267 = vmatpush1.msra.mxu0 0.0
    %1268 = vmatprep.subr.mxu0 0.0
    %1269 = vmatpush1.msra.mxu0 0.0
    %1270 = vmatprep.subr.mxu0 0.0
    %1271 = vmatpush1.msra.mxu0 0.0
    %1272 = vmatprep.mubr.f32.mxu0 0.0
    %1273 = vmatmul.mubr.f32.gmra.mrb[0].mxu0 %v1206
    %v1274 = vpop.f32.mrb[0].mxu0
    %v1275 = vadd.f32 %v1200, %v1274
    %v1276 = vpop.f32.mrb[0].mxu0
    %1277 = vdwg.mxu0
    %v1278 = vadd.f32 %v1275, %v222
    %v1279 = vxor.u32 %v1278, 2147483648
    %v1280 = vmul.f32 %v1279, 1.442695
    %v1281 = vpow.pop %v1280
    %v1282 = vadd.f32 %v1281, 1.0
    %v1283 = vrcp.pop %v1282
    %v1284 = vmul.f32 1.0, %v1283
    %v1285 = vtanh.pop %v1278
    %v1286 = vmul.f32 %v1284, %v1026
    %1288 = vrot.lane.b32.xlu0 %v1285, 64
    %v1289 = vpop.permute.xlu0 %1288
    %v1291 = vmul.f32 %v1284, %v1289
    %1293 = vrot.lane.b32.xlu0 %v1291, 32
    %v1294 = vpop.permute.xlu0 %1293
    %v1296 = vadd.f32 %v1286, %v1294
    %v1297 = vtanh.pop %v1296
    %1299 = vrot.lane.b32.xlu0 %v1297, 64
    %v1300 = vpop.permute.xlu0 %1299
    %v1302 = vmul.f32 %v1284, %v1300
    %1303 = vmatprep.subr.mxu0 0.0
    %1304 = vmatpush1.msra.mxu0 %v205
    %1305 = vmatprep.subr.mxu0 0.0
    %1306 = vmatpush1.msra.mxu0 %v206
    %1307 = vmatprep.subr.mxu0 0.0
    %1308 = vmatpush1.msra.mxu0 %v207
    %1309 = vmatprep.subr.mxu0 0.0
    %1310 = vmatpush1.msra.mxu0 %v208
    %1311 = vmatprep.subr.mxu0 0.0
    %1312 = vmatpush1.msra.mxu0 0.0
    %1313 = vmatprep.subr.mxu0 0.0
    %1314 = vmatpush1.msra.mxu0 0.0
    %1315 = vmatprep.subr.mxu0 0.0
    %1316 = vmatpush1.msra.mxu0 0.0
    %1317 = vmatprep.subr.mxu0 0.0
    %1318 = vmatpush1.msra.mxu0 0.0
    %1319 = vmatprep.subr.mxu0 0.0
    %1320 = vmatpush1.msra.mxu0 0.0
    %1321 = vmatprep.subr.mxu0 0.0
    %1322 = vmatpush1.msra.mxu0 0.0
    %1323 = vmatprep.subr.mxu0 0.0
    %1324 = vmatpush1.msra.mxu0 0.0
    %1325 = vmatprep.subr.mxu0 0.0
    %1326 = vmatpush1.msra.mxu0 0.0
    %1327 = vmatprep.subr.mxu0 0.0
    %1328 = vmatpush1.msra.mxu0 0.0
    %1329 = vmatprep.subr.mxu0 0.0
    %1330 = vmatpush1.msra.mxu0 0.0
    %1331 = vmatprep.subr.mxu0 0.0
    %1332 = vmatpush1.msra.mxu0 0.0
    %1333 = vmatprep.subr.mxu0 0.0
    %1334 = vmatpush1.msra.mxu0 0.0
    %1335 = vmatprep.subr.mxu0 0.0
    %1336 = vmatpush1.msra.mxu0 0.0
    %1337 = vmatprep.subr.mxu0 0.0
    %1338 = vmatpush1.msra.mxu0 0.0
    %1339 = vmatprep.subr.mxu0 0.0
    %1340 = vmatpush1.msra.mxu0 0.0
    %1341 = vmatprep.subr.mxu0 0.0
    %1342 = vmatpush1.msra.mxu0 0.0
    %1343 = vmatprep.subr.mxu0 0.0
    %1344 = vmatpush1.msra.mxu0 0.0
    %1345 = vmatprep.subr.mxu0 0.0
    %1346 = vmatpush1.msra.mxu0 0.0
    %1347 = vmatprep.subr.mxu0 0.0
    %1348 = vmatpush1.msra.mxu0 0.0
    %1349 = vmatprep.subr.mxu0 0.0
    %1350 = vmatpush1.msra.mxu0 0.0
    %1351 = vmatprep.subr.mxu0 0.0
    %1352 = vmatpush1.msra.mxu0 0.0
    %1353 = vmatprep.subr.mxu0 0.0
    %1354 = vmatpush1.msra.mxu0 0.0
    %1355 = vmatprep.subr.mxu0 0.0
    %1356 = vmatpush1.msra.mxu0 0.0
    %1357 = vmatprep.subr.mxu0 0.0
    %1358 = vmatpush1.msra.mxu0 0.0
    %1359 = vmatprep.subr.mxu0 0.0
    %1360 = vmatpush1.msra.mxu0 0.0
    %1361 = vmatprep.subr.mxu0 0.0
    %1362 = vmatpush1.msra.mxu0 0.0
    %1363 = vmatprep.subr.mxu0 0.0
    %1364 = vmatpush1.msra.mxu0 0.0
    %1365 = vmatprep.subr.mxu0 0.0
    %1366 = vmatpush1.msra.mxu0 0.0
    %1367 = vmatprep.mubr.f32.mxu0 0.0
    %1368 = vmatmul.mubr.f32.gmra.mrb[0].mxu0 %v1206
    %v1369 = vpop.f32.mrb[0].mxu0
    %v1370 = vadd.f32 0.0, %v1369
    %v1371 = vpop.f32.mrb[0].mxu0
    %1372 = vdwg.mxu0
    %v1373 = vadd.f32 %v187, %v1370
    %v1374 = vxor.u32 %v1373, 2147483648
    %v1375 = vmul.f32 %v1374, 1.442695
    %v1376 = vpow.pop %v1375
    %v1377 = vadd.f32 %v1376, 1.0
    %v1378 = vrcp.pop %v1377
    %v1379 = vmul.f32 1.0, %v1378
    %v1380 = vtanh.pop %v1373
    %v1381 = vmul.f32 %v1379, %v1121
    %1383 = vrot.lane.b32.xlu0 %v1380, 64
    %v1384 = vpop.permute.xlu0 %1383
    %v1386 = vmul.f32 %v1379, %v1384
    %1388 = vrot.lane.b32.xlu0 %v1386, 32
    %v1389 = vpop.permute.xlu0 %1388
    %v1391 = vadd.f32 %v1381, %v1389
    %v1392 = vtanh.pop %v1391
    %1394 = vrot.lane.b32.xlu0 %v1392, 64
    %v1395 = vpop.permute.xlu0 %1394
    %v1397 = vmul.f32 %v1379, %v1395
    %1399 = vrot.lane.b32.xlu0 %v1302, 32
    %v1400 = vpop.permute.xlu0 %1399
    %v1401 = vsel %vm224, %v1400, 0
    %1403 = vmatprep.subr.mxu0 0.0
    %1404 = vmatpush1.msra.mxu0 %v213
    %1405 = vmatprep.subr.mxu0 0.0
    %1406 = vmatpush1.msra.mxu0 %v214
    %1407 = vmatprep.subr.mxu0 0.0
    %1408 = vmatpush1.msra.mxu0 %v215
    %1409 = vmatprep.subr.mxu0 0.0
    %1410 = vmatpush1.msra.mxu0 %v216
    %1411 = vmatprep.subr.mxu0 0.0
    %1412 = vmatpush1.msra.mxu0 0.0
    %1413 = vmatprep.subr.mxu0 0.0
    %1414 = vmatpush1.msra.mxu0 0.0
    %1415 = vmatprep.subr.mxu0 0.0
    %1416 = vmatpush1.msra.mxu0 0.0
    %1417 = vmatprep.subr.mxu0 0.0
    %1418 = vmatpush1.msra.mxu0 0.0
    %1419 = vmatprep.subr.mxu0 0.0
    %1420 = vmatpush1.msra.mxu0 0.0
    %1421 = vmatprep.subr.mxu0 0.0
    %1422 = vmatpush1.msra.mxu0 0.0
    %1423 = vmatprep.subr.mxu0 0.0
    %1424 = vmatpush1.msra.mxu0 0.0
    %1425 = vmatprep.subr.mxu0 0.0
    %1426 = vmatpush1.msra.mxu0 0.0
    %1427 = vmatprep.subr.mxu0 0.0
    %1428 = vmatpush1.msra.mxu0 0.0
    %1429 = vmatprep.subr.mxu0 0.0
    %1430 = vmatpush1.msra.mxu0 0.0
    %1431 = vmatprep.subr.mxu0 0.0
    %1432 = vmatpush1.msra.mxu0 0.0
    %1433 = vmatprep.subr.mxu0 0.0
    %1434 = vmatpush1.msra.mxu0 0.0
    %1435 = vmatprep.subr.mxu0 0.0
    %1436 = vmatpush1.msra.mxu0 0.0
    %1437 = vmatprep.subr.mxu0 0.0
    %1438 = vmatpush1.msra.mxu0 0.0
    %1439 = vmatprep.subr.mxu0 0.0
    %1440 = vmatpush1.msra.mxu0 0.0
    %1441 = vmatprep.subr.mxu0 0.0
    %1442 = vmatpush1.msra.mxu0 0.0
    %1443 = vmatprep.subr.mxu0 0.0
    %1444 = vmatpush1.msra.mxu0 0.0
    %1445 = vmatprep.subr.mxu0 0.0
    %1446 = vmatpush1.msra.mxu0 0.0
    %1447 = vmatprep.subr.mxu0 0.0
    %1448 = vmatpush1.msra.mxu0 0.0
    %1449 = vmatprep.subr.mxu0 0.0
    %1450 = vmatpush1.msra.mxu0 0.0
    %1451 = vmatprep.subr.mxu0 0.0
    %1452 = vmatpush1.msra.mxu0 0.0
    %1453 = vmatprep.subr.mxu0 0.0
    %1454 = vmatpush1.msra.mxu0 0.0
    %1455 = vmatprep.subr.mxu0 0.0
    %1456 = vmatpush1.msra.mxu0 0.0
    %1457 = vmatprep.subr.mxu0 0.0
    %1458 = vmatpush1.msra.mxu0 0.0
    %1459 = vmatprep.subr.mxu0 0.0
    %1460 = vmatpush1.msra.mxu0 0.0
    %1461 = vmatprep.subr.mxu0 0.0
    %1462 = vmatpush1.msra.mxu0 0.0
    %1463 = vmatprep.subr.mxu0 0.0
    %1464 = vmatpush1.msra.mxu0 0.0
    %1465 = vmatprep.subr.mxu0 0.0
    %1466 = vmatpush1.msra.mxu0 0.0
    %1467 = vmatprep.mubr.f32.mxu0 0.0
    %1468 = vmatmul.mubr.f32.gmra.mrb[0].mxu0 %v1401
    %v1469 = vpop.f32.mrb[0].mxu0
    %v1470 = vadd.f32 0.0, %v1469
    %v1471 = vpop.f32.mrb[0].mxu0
    %1472 = vdwg.mxu0
    %1474 = vrot.lane.b32.xlu0 %v1397, 32
    %v1475 = vpop.permute.xlu0 %1474
    %v1476 = vsel %vm224, %v1475, 0
    %1478 = vmatprep.subr.mxu0 0.0
    %1479 = vmatpush1.msra.mxu0 %v209
    %1480 = vmatprep.subr.mxu0 0.0
    %1481 = vmatpush1.msra.mxu0 %v210
    %1482 = vmatprep.subr.mxu0 0.0
    %1483 = vmatpush1.msra.mxu0 %v211
    %1484 = vmatprep.subr.mxu0 0.0
    %1485 = vmatpush1.msra.mxu0 %v212
    %1486 = vmatprep.subr.mxu0 0.0
    %1487 = vmatpush1.msra.mxu0 0.0
    %1488 = vmatprep.subr.mxu0 0.0
    %1489 = vmatpush1.msra.mxu0 0.0
    %1490 = vmatprep.subr.mxu0 0.0
    %1491 = vmatpush1.msra.mxu0 0.0
    %1492 = vmatprep.subr.mxu0 0.0
    %1493 = vmatpush1.msra.mxu0 0.0
    %1494 = vmatprep.subr.mxu0 0.0
    %1495 = vmatpush1.msra.mxu0 0.0
    %1496 = vmatprep.subr.mxu0 0.0
    %1497 = vmatpush1.msra.mxu0 0.0
    %1498 = vmatprep.subr.mxu0 0.0
    %1499 = vmatpush1.msra.mxu0 0.0
    %1500 = vmatprep.subr.mxu0 0.0
    %1501 = vmatpush1.msra.mxu0 0.0
    %1502 = vmatprep.subr.mxu0 0.0
    %1503 = vmatpush1.msra.mxu0 0.0
    %1504 = vmatprep.subr.mxu0 0.0
    %1505 = vmatpush1.msra.mxu0 0.0
    %1506 = vmatprep.subr.mxu0 0.0
    %1507 = vmatpush1.msra.mxu0 0.0
    %1508 = vmatprep.subr.mxu0 0.0
    %1509 = vmatpush1.msra.mxu0 0.0
    %1510 = vmatprep.subr.mxu0 0.0
    %1511 = vmatpush1.msra.mxu0 0.0
    %1512 = vmatprep.subr.mxu0 0.0
    %1513 = vmatpush1.msra.mxu0 0.0
    %1514 = vmatprep.subr.mxu0 0.0
    %1515 = vmatpush1.msra.mxu0 0.0
    %1516 = vmatprep.subr.mxu0 0.0
    %1517 = vmatpush1.msra.mxu0 0.0
    %1518 = vmatprep.subr.mxu0 0.0
    %1519 = vmatpush1.msra.mxu0 0.0
    %1520 = vmatprep.subr.mxu0 0.0
    %1521 = vmatpush1.msra.mxu0 0.0
    %1522 = vmatprep.subr.mxu0 0.0
    %1523 = vmatpush1.msra.mxu0 0.0
    %1524 = vmatprep.subr.mxu0 0.0
    %1525 = vmatpush1.msra.mxu0 0.0
    %1526 = vmatprep.subr.mxu0 0.0
    %1527 = vmatpush1.msra.mxu0 0.0
    %1528 = vmatprep.subr.mxu0 0.0
    %1529 = vmatpush1.msra.mxu0 0.0
    %1530 = vmatprep.subr.mxu0 0.0
    %1531 = vmatpush1.msra.mxu0 0.0
    %1532 = vmatprep.subr.mxu0 0.0
    %1533 = vmatpush1.msra.mxu0 0.0
    %1534 = vmatprep.subr.mxu0 0.0
    %1535 = vmatpush1.msra.mxu0 0.0
    %1536 = vmatprep.subr.mxu0 0.0
    %1537 = vmatpush1.msra.mxu0 0.0
    %1538 = vmatprep.subr.mxu0 0.0
    %1539 = vmatpush1.msra.mxu0 0.0
    %1540 = vmatprep.subr.mxu0 0.0
    %1541 = vmatpush1.msra.mxu0 0.0
    %1542 = vmatprep.mubr.f32.mxu0 0.0
    %1543 = vmatmul.mubr.f32.gmra.mrb[0].mxu0 %v1476
    %v1544 = vpop.f32.mrb[0].mxu0
    %v1545 = vadd.f32 %v1470, %v1544
    %v1546 = vpop.f32.mrb[0].mxu0
    %1547 = vdwg.mxu0
    %v1548 = vadd.f32 %v1545, %v222
    %v1549 = vxor.u32 %v1548, 2147483648
    %v1550 = vmul.f32 %v1549, 1.442695
    %v1551 = vpow.pop %v1550
    %v1552 = vadd.f32 %v1551, 1.0
    %v1553 = vrcp.pop %v1552
    %v1554 = vmul.f32 1.0, %v1553
    %v1555 = vtanh.pop %v1548
    %v1556 = vmul.f32 %v1554, %v1296
    %1558 = vrot.lane.b32.xlu0 %v1555, 64
    %v1559 = vpop.permute.xlu0 %1558
    %v1561 = vmul.f32 %v1554, %v1559
    %1563 = vrot.lane.b32.xlu0 %v1561, 32
    %v1564 = vpop.permute.xlu0 %1563
    %v1566 = vadd.f32 %v1556, %v1564
    %v1567 = vtanh.pop %v1566
    %1569 = vrot.lane.b32.xlu0 %v1567, 64
    %v1570 = vpop.permute.xlu0 %1569
    %v1572 = vmul.f32 %v1554, %v1570
    %1573 = vmatprep.subr.mxu0 0.0
    %1574 = vmatpush1.msra.mxu0 %v205
    %1575 = vmatprep.subr.mxu0 0.0
    %1576 = vmatpush1.msra.mxu0 %v206
    %1577 = vmatprep.subr.mxu0 0.0
    %1578 = vmatpush1.msra.mxu0 %v207
    %1579 = vmatprep.subr.mxu0 0.0
    %1580 = vmatpush1.msra.mxu0 %v208
    %1581 = vmatprep.subr.mxu0 0.0
    %1582 = vmatpush1.msra.mxu0 0.0
    %1583 = vmatprep.subr.mxu0 0.0
    %1584 = vmatpush1.msra.mxu0 0.0
    %1585 = vmatprep.subr.mxu0 0.0
    %1586 = vmatpush1.msra.mxu0 0.0
    %1587 = vmatprep.subr.mxu0 0.0
    %1588 = vmatpush1.msra.mxu0 0.0
    %1589 = vmatprep.subr.mxu0 0.0
    %1590 = vmatpush1.msra.mxu0 0.0
    %1591 = vmatprep.subr.mxu0 0.0
    %1592 = vmatpush1.msra.mxu0 0.0
    %1593 = vmatprep.subr.mxu0 0.0
    %1594 = vmatpush1.msra.mxu0 0.0
    %1595 = vmatprep.subr.mxu0 0.0
    %1596 = vmatpush1.msra.mxu0 0.0
    %1597 = vmatprep.subr.mxu0 0.0
    %1598 = vmatpush1.msra.mxu0 0.0
    %1599 = vmatprep.subr.mxu0 0.0
    %1600 = vmatpush1.msra.mxu0 0.0
    %1601 = vmatprep.subr.mxu0 0.0
    %1602 = vmatpush1.msra.mxu0 0.0
    %1603 = vmatprep.subr.mxu0 0.0
    %1604 = vmatpush1.msra.mxu0 0.0
    %1605 = vmatprep.subr.mxu0 0.0
    %1606 = vmatpush1.msra.mxu0 0.0
    %1607 = vmatprep.subr.mxu0 0.0
    %1608 = vmatpush1.msra.mxu0 0.0
    %1609 = vmatprep.subr.mxu0 0.0
    %1610 = vmatpush1.msra.mxu0 0.0
    %1611 = vmatprep.subr.mxu0 0.0
    %1612 = vmatpush1.msra.mxu0 0.0
    %1613 = vmatprep.subr.mxu0 0.0
    %1614 = vmatpush1.msra.mxu0 0.0
    %1615 = vmatprep.subr.mxu0 0.0
    %1616 = vmatpush1.msra.mxu0 0.0
    %1617 = vmatprep.subr.mxu0 0.0
    %1618 = vmatpush1.msra.mxu0 0.0
    %1619 = vmatprep.subr.mxu0 0.0
    %1620 = vmatpush1.msra.mxu0 0.0
    %1621 = vmatprep.subr.mxu0 0.0
    %1622 = vmatpush1.msra.mxu0 0.0
    %1623 = vmatprep.subr.mxu0 0.0
    %1624 = vmatpush1.msra.mxu0 0.0
    %1625 = vmatprep.subr.mxu0 0.0
    %1626 = vmatpush1.msra.mxu0 0.0
    %1627 = vmatprep.subr.mxu0 0.0
    %1628 = vmatpush1.msra.mxu0 0.0
    %1629 = vmatprep.subr.mxu0 0.0
    %1630 = vmatpush1.msra.mxu0 0.0
    %1631 = vmatprep.subr.mxu0 0.0
    %1632 = vmatpush1.msra.mxu0 0.0
    %1633 = vmatprep.subr.mxu0 0.0
    %1634 = vmatpush1.msra.mxu0 0.0
    %1635 = vmatprep.subr.mxu0 0.0
    %1636 = vmatpush1.msra.mxu0 0.0
    %1637 = vmatprep.mubr.f32.mxu0 0.0
    %1638 = vmatmul.mubr.f32.gmra.mrb[0].mxu0 %v1476
    %v1639 = vpop.f32.mrb[0].mxu0
    %v1640 = vadd.f32 0.0, %v1639
    %v1641 = vpop.f32.mrb[0].mxu0
    %1642 = vdwg.mxu0
    %v1643 = vadd.f32 %v192, %v1640
    %v1644 = vxor.u32 %v1643, 2147483648
    %v1645 = vmul.f32 %v1644, 1.442695
    %v1646 = vpow.pop %v1645
    %v1647 = vadd.f32 %v1646, 1.0
    %v1648 = vrcp.pop %v1647
    %v1649 = vmul.f32 1.0, %v1648
    %v1650 = vtanh.pop %v1643
    %v1651 = vmul.f32 %v1649, %v1391
    %1653 = vrot.lane.b32.xlu0 %v1650, 64
    %v1654 = vpop.permute.xlu0 %1653
    %v1656 = vmul.f32 %v1649, %v1654
    %1658 = vrot.lane.b32.xlu0 %v1656, 32
    %v1659 = vpop.permute.xlu0 %1658
    %v1661 = vadd.f32 %v1651, %v1659
    %v1662 = vtanh.pop %v1661
    %1664 = vrot.lane.b32.xlu0 %v1662, 64
    %v1665 = vpop.permute.xlu0 %1664
    %v1667 = vmul.f32 %v1649, %v1665
    %1669 = vrot.lane.b32.xlu0 %v1572, 32
    %v1670 = vpop.permute.xlu0 %1669
    %v1671 = vsel %vm224, %v1670, 0
    %1673 = vmatprep.subr.mxu0 0.0
    %1674 = vmatpush1.msra.mxu0 %v213
    %1675 = vmatprep.subr.mxu0 0.0
    %1676 = vmatpush1.msra.mxu0 %v214
    %1677 = vmatprep.subr.mxu0 0.0
    %1678 = vmatpush1.msra.mxu0 %v215
    %1679 = vmatprep.subr.mxu0 0.0
    %1680 = vmatpush1.msra.mxu0 %v216
    %1681 = vmatprep.subr.mxu0 0.0
    %1682 = vmatpush1.msra.mxu0 0.0
    %1683 = vmatprep.subr.mxu0 0.0
    %1684 = vmatpush1.msra.mxu0 0.0
    %1685 = vmatprep.subr.mxu0 0.0
    %1686 = vmatpush1.msra.mxu0 0.0
    %1687 = vmatprep.subr.mxu0 0.0
    %1688 = vmatpush1.msra.mxu0 0.0
    %1689 = vmatprep.subr.mxu0 0.0
    %1690 = vmatpush1.msra.mxu0 0.0
    %1691 = vmatprep.subr.mxu0 0.0
    %1692 = vmatpush1.msra.mxu0 0.0
    %1693 = vmatprep.subr.mxu0 0.0
    %1694 = vmatpush1.msra.mxu0 0.0
    %1695 = vmatprep.subr.mxu0 0.0
    %1696 = vmatpush1.msra.mxu0 0.0
    %1697 = vmatprep.subr.mxu0 0.0
    %1698 = vmatpush1.msra.mxu0 0.0
    %1699 = vmatprep.subr.mxu0 0.0
    %1700 = vmatpush1.msra.mxu0 0.0
    %1701 = vmatprep.subr.mxu0 0.0
    %1702 = vmatpush1.msra.mxu0 0.0
    %1703 = vmatprep.subr.mxu0 0.0
    %1704 = vmatpush1.msra.mxu0 0.0
    %1705 = vmatprep.subr.mxu0 0.0
    %1706 = vmatpush1.msra.mxu0 0.0
    %1707 = vmatprep.subr.mxu0 0.0
    %1708 = vmatpush1.msra.mxu0 0.0
    %1709 = vmatprep.subr.mxu0 0.0
    %1710 = vmatpush1.msra.mxu0 0.0
    %1711 = vmatprep.subr.mxu0 0.0
    %1712 = vmatpush1.msra.mxu0 0.0
    %1713 = vmatprep.subr.mxu0 0.0
    %1714 = vmatpush1.msra.mxu0 0.0
    %1715 = vmatprep.subr.mxu0 0.0
    %1716 = vmatpush1.msra.mxu0 0.0
    %1717 = vmatprep.subr.mxu0 0.0
    %1718 = vmatpush1.msra.mxu0 0.0
    %1719 = vmatprep.subr.mxu0 0.0
    %1720 = vmatpush1.msra.mxu0 0.0
    %1721 = vmatprep.subr.mxu0 0.0
    %1722 = vmatpush1.msra.mxu0 0.0
    %1723 = vmatprep.subr.mxu0 0.0
    %1724 = vmatpush1.msra.mxu0 0.0
    %1725 = vmatprep.subr.mxu0 0.0
    %1726 = vmatpush1.msra.mxu0 0.0
    %1727 = vmatprep.subr.mxu0 0.0
    %1728 = vmatpush1.msra.mxu0 0.0
    %1729 = vmatprep.subr.mxu0 0.0
    %1730 = vmatpush1.msra.mxu0 0.0
    %1731 = vmatprep.subr.mxu0 0.0
    %1732 = vmatpush1.msra.mxu0 0.0
    %1733 = vmatprep.subr.mxu0 0.0
    %1734 = vmatpush1.msra.mxu0 0.0
    %1735 = vmatprep.subr.mxu0 0.0
    %1736 = vmatpush1.msra.mxu0 0.0
    %1737 = vmatprep.mubr.f32.mxu0 0.0
    %1738 = vmatmul.mubr.f32.gmra.mrb[0].mxu0 %v1671
    %v1739 = vpop.f32.mrb[0].mxu0
    %v1740 = vadd.f32 0.0, %v1739
    %v1741 = vpop.f32.mrb[0].mxu0
    %1742 = vdwg.mxu0
    %1744 = vrot.lane.b32.xlu0 %v1667, 32
    %v1745 = vpop.permute.xlu0 %1744
    %v1746 = vsel %vm224, %v1745, 0
    %1748 = vmatprep.subr.mxu0 0.0
    %1749 = vmatpush1.msra.mxu0 %v209
    %1750 = vmatprep.subr.mxu0 0.0
    %1751 = vmatpush1.msra.mxu0 %v210
    %1752 = vmatprep.subr.mxu0 0.0
    %1753 = vmatpush1.msra.mxu0 %v211
    %1754 = vmatprep.subr.mxu0 0.0
    %1755 = vmatpush1.msra.mxu0 %v212
    %1756 = vmatprep.subr.mxu0 0.0
    %1757 = vmatpush1.msra.mxu0 0.0
    %1758 = vmatprep.subr.mxu0 0.0
    %1759 = vmatpush1.msra.mxu0 0.0
    %1760 = vmatprep.subr.mxu0 0.0
    %1761 = vmatpush1.msra.mxu0 0.0
    %1762 = vmatprep.subr.mxu0 0.0
    %1763 = vmatpush1.msra.mxu0 0.0
    %1764 = vmatprep.subr.mxu0 0.0
    %1765 = vmatpush1.msra.mxu0 0.0
    %1766 = vmatprep.subr.mxu0 0.0
    %1767 = vmatpush1.msra.mxu0 0.0
    %1768 = vmatprep.subr.mxu0 0.0
    %1769 = vmatpush1.msra.mxu0 0.0
    %1770 = vmatprep.subr.mxu0 0.0
    %1771 = vmatpush1.msra.mxu0 0.0
    %1772 = vmatprep.subr.mxu0 0.0
    %1773 = vmatpush1.msra.mxu0 0.0
    %1774 = vmatprep.subr.mxu0 0.0
    %1775 = vmatpush1.msra.mxu0 0.0
    %1776 = vmatprep.subr.mxu0 0.0
    %1777 = vmatpush1.msra.mxu0 0.0
    %1778 = vmatprep.subr.mxu0 0.0
    %1779 = vmatpush1.msra.mxu0 0.0
    %1780 = vmatprep.subr.mxu0 0.0
    %1781 = vmatpush1.msra.mxu0 0.0
    %1782 = vmatprep.subr.mxu0 0.0
    %1783 = vmatpush1.msra.mxu0 0.0
    %1784 = vmatprep.subr.mxu0 0.0
    %1785 = vmatpush1.msra.mxu0 0.0
    %1786 = vmatprep.subr.mxu0 0.0
    %1787 = vmatpush1.msra.mxu0 0.0
    %1788 = vmatprep.subr.mxu0 0.0
    %1789 = vmatpush1.msra.mxu0 0.0
    %1790 = vmatprep.subr.mxu0 0.0
    %1791 = vmatpush1.msra.mxu0 0.0
    %1792 = vmatprep.subr.mxu0 0.0
    %1793 = vmatpush1.msra.mxu0 0.0
    %1794 = vmatprep.subr.mxu0 0.0
    %1795 = vmatpush1.msra.mxu0 0.0
    %1796 = vmatprep.subr.mxu0 0.0
    %1797 = vmatpush1.msra.mxu0 0.0
    %1798 = vmatprep.subr.mxu0 0.0
    %1799 = vmatpush1.msra.mxu0 0.0
    %1800 = vmatprep.subr.mxu0 0.0
    %1801 = vmatpush1.msra.mxu0 0.0
    %1802 = vmatprep.subr.mxu0 0.0
    %1803 = vmatpush1.msra.mxu0 0.0
    %1804 = vmatprep.subr.mxu0 0.0
    %1805 = vmatpush1.msra.mxu0 0.0
    %1806 = vmatprep.subr.mxu0 0.0
    %1807 = vmatpush1.msra.mxu0 0.0
    %1808 = vmatprep.subr.mxu0 0.0
    %1809 = vmatpush1.msra.mxu0 0.0
    %1810 = vmatprep.subr.mxu0 0.0
    %1811 = vmatpush1.msra.mxu0 0.0
    %1812 = vmatprep.mubr.f32.mxu0 0.0
    %1813 = vmatmul.mubr.f32.gmra.mrb[0].mxu0 %v1746
    %v1814 = vpop.f32.mrb[0].mxu0
    %v1815 = vadd.f32 %v1740, %v1814
    %v1816 = vpop.f32.mrb[0].mxu0
    %1817 = vdwg.mxu0
    %v1818 = vadd.f32 %v1815, %v222
    %v1819 = vxor.u32 %v1818, 2147483648
    %v1820 = vmul.f32 %v1819, 1.442695
    %v1821 = vpow.pop %v1820
    %v1822 = vadd.f32 %v1821, 1.0
    %v1823 = vrcp.pop %v1822
    %v1824 = vmul.f32 1.0, %v1823
    %v1825 = vtanh.pop %v1818
    %v1826 = vmul.f32 %v1824, %v1566
    %1828 = vrot.lane.b32.xlu0 %v1825, 64
    %v1829 = vpop.permute.xlu0 %1828
    %v1831 = vmul.f32 %v1824, %v1829
    %1833 = vrot.lane.b32.xlu0 %v1831, 32
    %v1834 = vpop.permute.xlu0 %1833
    %v1836 = vadd.f32 %v1826, %v1834
    %v1837 = vtanh.pop %v1836
    %1839 = vrot.lane.b32.xlu0 %v1837, 64
    %v1840 = vpop.permute.xlu0 %1839
    %v1842 = vmul.f32 %v1824, %v1840
    %1843 = vmatprep.subr.mxu0 0.0
    %1844 = vmatpush1.msra.mxu0 %v205
    %1845 = vmatprep.subr.mxu0 0.0
    %1846 = vmatpush1.msra.mxu0 %v206
    %1847 = vmatprep.subr.mxu0 0.0
    %1848 = vmatpush1.msra.mxu0 %v207
    %1849 = vmatprep.subr.mxu0 0.0
    %1850 = vmatpush1.msra.mxu0 %v208
    %1851 = vmatprep.subr.mxu0 0.0
    %1852 = vmatpush1.msra.mxu0 0.0
    %1853 = vmatprep.subr.mxu0 0.0
    %1854 = vmatpush1.msra.mxu0 0.0
    %1855 = vmatprep.subr.mxu0 0.0
    %1856 = vmatpush1.msra.mxu0 0.0
    %1857 = vmatprep.subr.mxu0 0.0
    %1858 = vmatpush1.msra.mxu0 0.0
    %1859 = vmatprep.subr.mxu0 0.0
    %1860 = vmatpush1.msra.mxu0 0.0
    %1861 = vmatprep.subr.mxu0 0.0
    %1862 = vmatpush1.msra.mxu0 0.0
    %1863 = vmatprep.subr.mxu0 0.0
    %1864 = vmatpush1.msra.mxu0 0.0
    %1865 = vmatprep.subr.mxu0 0.0
    %1866 = vmatpush1.msra.mxu0 0.0
    %1867 = vmatprep.subr.mxu0 0.0
    %1868 = vmatpush1.msra.mxu0 0.0
    %1869 = vmatprep.subr.mxu0 0.0
    %1870 = vmatpush1.msra.mxu0 0.0
    %1871 = vmatprep.subr.mxu0 0.0
    %1872 = vmatpush1.msra.mxu0 0.0
    %1873 = vmatprep.subr.mxu0 0.0
    %1874 = vmatpush1.msra.mxu0 0.0
    %1875 = vmatprep.subr.mxu0 0.0
    %1876 = vmatpush1.msra.mxu0 0.0
    %1877 = vmatprep.subr.mxu0 0.0
    %1878 = vmatpush1.msra.mxu0 0.0
    %1879 = vmatprep.subr.mxu0 0.0
    %1880 = vmatpush1.msra.mxu0 0.0
    %1881 = vmatprep.subr.mxu0 0.0
    %1882 = vmatpush1.msra.mxu0 0.0
    %1883 = vmatprep.subr.mxu0 0.0
    %1884 = vmatpush1.msra.mxu0 0.0
    %1885 = vmatprep.subr.mxu0 0.0
    %1886 = vmatpush1.msra.mxu0 0.0
    %1887 = vmatprep.subr.mxu0 0.0
    %1888 = vmatpush1.msra.mxu0 0.0
    %1889 = vmatprep.subr.mxu0 0.0
    %1890 = vmatpush1.msra.mxu0 0.0
    %1891 = vmatprep.subr.mxu0 0.0
    %1892 = vmatpush1.msra.mxu0 0.0
    %1893 = vmatprep.subr.mxu0 0.0
    %1894 = vmatpush1.msra.mxu0 0.0
    %1895 = vmatprep.subr.mxu0 0.0
    %1896 = vmatpush1.msra.mxu0 0.0
    %1897 = vmatprep.subr.mxu0 0.0
    %1898 = vmatpush1.msra.mxu0 0.0
    %1899 = vmatprep.subr.mxu0 0.0
    %1900 = vmatpush1.msra.mxu0 0.0
    %1901 = vmatprep.subr.mxu0 0.0
    %1902 = vmatpush1.msra.mxu0 0.0
    %1903 = vmatprep.subr.mxu0 0.0
    %1904 = vmatpush1.msra.mxu0 0.0
    %1905 = vmatprep.subr.mxu0 0.0
    %1906 = vmatpush1.msra.mxu0 0.0
    %1907 = vmatprep.mubr.f32.mxu0 0.0
    %1908 = vmatmul.mubr.f32.gmra.mrb[0].mxu0 %v1746
    %v1909 = vpop.f32.mrb[0].mxu0
    %v1910 = vadd.f32 0.0, %v1909
    %v1911 = vpop.f32.mrb[0].mxu0
    %1912 = vdwg.mxu0
    %v1913 = vadd.f32 %v197, %v1910
    %v1914 = vxor.u32 %v1913, 2147483648
    %v1915 = vmul.f32 %v1914, 1.442695
    %v1916 = vpow.pop %v1915
    %v1917 = vadd.f32 %v1916, 1.0
    %v1918 = vrcp.pop %v1917
    %v1919 = vmul.f32 1.0, %v1918
    %v1920 = vtanh.pop %v1913
    %v1921 = vmul.f32 %v1919, %v1661
    %1923 = vrot.lane.b32.xlu0 %v1920, 64
    %v1924 = vpop.permute.xlu0 %1923
    %v1926 = vmul.f32 %v1919, %v1924
    %1928 = vrot.lane.b32.xlu0 %v1926, 32
    %v1929 = vpop.permute.xlu0 %1928
    %v1931 = vadd.f32 %v1921, %v1929
    %v1932 = vtanh.pop %v1931
    %1934 = vrot.lane.b32.xlu0 %v1932, 64
    %v1935 = vpop.permute.xlu0 %1934
    %v1937 = vmul.f32 %v1919, %v1935
    %1939 = vrot.lane.b32.xlu0 %v1842, 32
    %v1940 = vpop.permute.xlu0 %1939
    %v1941 = vsel %vm224, %v1940, 0
    %1943 = vmatprep.subr.mxu0 0.0
    %1944 = vmatpush1.msra.mxu0 %v213
    %1945 = vmatprep.subr.mxu0 0.0
    %1946 = vmatpush1.msra.mxu0 %v214
    %1947 = vmatprep.subr.mxu0 0.0
    %1948 = vmatpush1.msra.mxu0 %v215
    %1949 = vmatprep.subr.mxu0 0.0
    %1950 = vmatpush1.msra.mxu0 %v216
    %1951 = vmatprep.subr.mxu0 0.0
    %1952 = vmatpush1.msra.mxu0 0.0
    %1953 = vmatprep.subr.mxu0 0.0
    %1954 = vmatpush1.msra.mxu0 0.0
    %1955 = vmatprep.subr.mxu0 0.0
    %1956 = vmatpush1.msra.mxu0 0.0
    %1957 = vmatprep.subr.mxu0 0.0
    %1958 = vmatpush1.msra.mxu0 0.0
    %1959 = vmatprep.subr.mxu0 0.0
    %1960 = vmatpush1.msra.mxu0 0.0
    %1961 = vmatprep.subr.mxu0 0.0
    %1962 = vmatpush1.msra.mxu0 0.0
    %1963 = vmatprep.subr.mxu0 0.0
    %1964 = vmatpush1.msra.mxu0 0.0
    %1965 = vmatprep.subr.mxu0 0.0
    %1966 = vmatpush1.msra.mxu0 0.0
    %1967 = vmatprep.subr.mxu0 0.0
    %1968 = vmatpush1.msra.mxu0 0.0
    %1969 = vmatprep.subr.mxu0 0.0
    %1970 = vmatpush1.msra.mxu0 0.0
    %1971 = vmatprep.subr.mxu0 0.0
    %1972 = vmatpush1.msra.mxu0 0.0
    %1973 = vmatprep.subr.mxu0 0.0
    %1974 = vmatpush1.msra.mxu0 0.0
    %1975 = vmatprep.subr.mxu0 0.0
    %1976 = vmatpush1.msra.mxu0 0.0
    %1977 = vmatprep.subr.mxu0 0.0
    %1978 = vmatpush1.msra.mxu0 0.0
    %1979 = vmatprep.subr.mxu0 0.0
    %1980 = vmatpush1.msra.mxu0 0.0
    %1981 = vmatprep.subr.mxu0 0.0
    %1982 = vmatpush1.msra.mxu0 0.0
    %1983 = vmatprep.subr.mxu0 0.0
    %1984 = vmatpush1.msra.mxu0 0.0
    %1985 = vmatprep.subr.mxu0 0.0
    %1986 = vmatpush1.msra.mxu0 0.0
    %1987 = vmatprep.subr.mxu0 0.0
    %1988 = vmatpush1.msra.mxu0 0.0
    %1989 = vmatprep.subr.mxu0 0.0
    %1990 = vmatpush1.msra.mxu0 0.0
    %1991 = vmatprep.subr.mxu0 0.0
    %1992 = vmatpush1.msra.mxu0 0.0
    %1993 = vmatprep.subr.mxu0 0.0
    %1994 = vmatpush1.msra.mxu0 0.0
    %1995 = vmatprep.subr.mxu0 0.0
    %1996 = vmatpush1.msra.mxu0 0.0
    %1997 = vmatprep.subr.mxu0 0.0
    %1998 = vmatpush1.msra.mxu0 0.0
    %1999 = vmatprep.subr.mxu0 0.0
    %2000 = vmatpush1.msra.mxu0 0.0
    %2001 = vmatprep.subr.mxu0 0.0
    %2002 = vmatpush1.msra.mxu0 0.0
    %2003 = vmatprep.subr.mxu0 0.0
    %2004 = vmatpush1.msra.mxu0 0.0
    %2005 = vmatprep.subr.mxu0 0.0
    %2006 = vmatpush1.msra.mxu0 0.0
    %2007 = vmatprep.mubr.f32.mxu0 0.0
    %2008 = vmatmul.mubr.f32.gmra.mrb[0].mxu0 %v1941
    %v2009 = vpop.f32.mrb[0].mxu0
    %v2010 = vadd.f32 0.0, %v2009
    %v2011 = vpop.f32.mrb[0].mxu0
    %2012 = vdwg.mxu0
    %2014 = vrot.lane.b32.xlu0 %v1937, 32
    %v2015 = vpop.permute.xlu0 %2014
    %v2016 = vsel %vm224, %v2015, 0
    %2018 = vmatprep.subr.mxu0 0.0
    %2019 = vmatpush1.msra.mxu0 %v209
    %2020 = vmatprep.subr.mxu0 0.0
    %2021 = vmatpush1.msra.mxu0 %v210
    %2022 = vmatprep.subr.mxu0 0.0
    %2023 = vmatpush1.msra.mxu0 %v211
    %2024 = vmatprep.subr.mxu0 0.0
    %2025 = vmatpush1.msra.mxu0 %v212
    %2026 = vmatprep.subr.mxu0 0.0
    %2027 = vmatpush1.msra.mxu0 0.0
    %2028 = vmatprep.subr.mxu0 0.0
    %2029 = vmatpush1.msra.mxu0 0.0
    %2030 = vmatprep.subr.mxu0 0.0
    %2031 = vmatpush1.msra.mxu0 0.0
    %2032 = vmatprep.subr.mxu0 0.0
    %2033 = vmatpush1.msra.mxu0 0.0
    %2034 = vmatprep.subr.mxu0 0.0
    %2035 = vmatpush1.msra.mxu0 0.0
    %2036 = vmatprep.subr.mxu0 0.0
    %2037 = vmatpush1.msra.mxu0 0.0
    %2038 = vmatprep.subr.mxu0 0.0
    %2039 = vmatpush1.msra.mxu0 0.0
    %2040 = vmatprep.subr.mxu0 0.0
    %2041 = vmatpush1.msra.mxu0 0.0
    %2042 = vmatprep.subr.mxu0 0.0
    %2043 = vmatpush1.msra.mxu0 0.0
    %2044 = vmatprep.subr.mxu0 0.0
    %2045 = vmatpush1.msra.mxu0 0.0
    %2046 = vmatprep.subr.mxu0 0.0
    %2047 = vmatpush1.msra.mxu0 0.0
    %2048 = vmatprep.subr.mxu0 0.0
    %2049 = vmatpush1.msra.mxu0 0.0
    %2050 = vmatprep.subr.mxu0 0.0
    %2051 = vmatpush1.msra.mxu0 0.0
    %2052 = vmatprep.subr.mxu0 0.0
    %2053 = vmatpush1.msra.mxu0 0.0
    %2054 = vmatprep.subr.mxu0 0.0
    %2055 = vmatpush1.msra.mxu0 0.0
    %2056 = vmatprep.subr.mxu0 0.0
    %2057 = vmatpush1.msra.mxu0 0.0
    %2058 = vmatprep.subr.mxu0 0.0
    %2059 = vmatpush1.msra.mxu0 0.0
    %2060 = vmatprep.subr.mxu0 0.0
    %2061 = vmatpush1.msra.mxu0 0.0
    %2062 = vmatprep.subr.mxu0 0.0
    %2063 = vmatpush1.msra.mxu0 0.0
    %2064 = vmatprep.subr.mxu0 0.0
    %2065 = vmatpush1.msra.mxu0 0.0
    %2066 = vmatprep.subr.mxu0 0.0
    %2067 = vmatpush1.msra.mxu0 0.0
    %2068 = vmatprep.subr.mxu0 0.0
    %2069 = vmatpush1.msra.mxu0 0.0
    %2070 = vmatprep.subr.mxu0 0.0
    %2071 = vmatpush1.msra.mxu0 0.0
    %2072 = vmatprep.subr.mxu0 0.0
    %2073 = vmatpush1.msra.mxu0 0.0
    %2074 = vmatprep.subr.mxu0 0.0
    %2075 = vmatpush1.msra.mxu0 0.0
    %2076 = vmatprep.subr.mxu0 0.0
    %2077 = vmatpush1.msra.mxu0 0.0
    %2078 = vmatprep.subr.mxu0 0.0
    %2079 = vmatpush1.msra.mxu0 0.0
    %2080 = vmatprep.subr.mxu0 0.0
    %2081 = vmatpush1.msra.mxu0 0.0
    %2082 = vmatprep.mubr.f32.mxu0 0.0
    %2083 = vmatmul.mubr.f32.gmra.mrb[0].mxu0 %v2016
    %v2084 = vpop.f32.mrb[0].mxu0
    %v2085 = vadd.f32 %v2010, %v2084
    %v2086 = vpop.f32.mrb[0].mxu0
    %2087 = vdwg.mxu0
    %v2088 = vadd.f32 %v2085, %v222
    %v2089 = vxor.u32 %v2088, 2147483648
    %v2090 = vmul.f32 %v2089, 1.442695
    %v2091 = vpow.pop %v2090
    %v2092 = vadd.f32 %v2091, 1.0
    %v2093 = vrcp.pop %v2092
    %v2094 = vmul.f32 1.0, %v2093
    %v2095 = vtanh.pop %v2088
    %v2096 = vmul.f32 %v2094, %v1836
    %2098 = vrot.lane.b32.xlu0 %v2095, 64
    %v2099 = vpop.permute.xlu0 %2098
    %v2101 = vmul.f32 %v2094, %v2099
    %2103 = vrot.lane.b32.xlu0 %v2101, 32
    %v2104 = vpop.permute.xlu0 %2103
    %v2106 = vadd.f32 %v2096, %v2104
    %v2107 = vtanh.pop %v2106
    %2109 = vrot.lane.b32.xlu0 %v2107, 64
    %v2110 = vpop.permute.xlu0 %2109
    %v2112 = vmul.f32 %v2094, %v2110
    %2113 = vmatprep.subr.mxu0 0.0
    %2114 = vmatpush1.msra.mxu0 %v205
    %2115 = vmatprep.subr.mxu0 0.0
    %2116 = vmatpush1.msra.mxu0 %v206
    %2117 = vmatprep.subr.mxu0 0.0
    %2118 = vmatpush1.msra.mxu0 %v207
    %2119 = vmatprep.subr.mxu0 0.0
    %2120 = vmatpush1.msra.mxu0 %v208
    %2121 = vmatprep.subr.mxu0 0.0
    %2122 = vmatpush1.msra.mxu0 0.0
    %2123 = vmatprep.subr.mxu0 0.0
    %2124 = vmatpush1.msra.mxu0 0.0
    %2125 = vmatprep.subr.mxu0 0.0
    %2126 = vmatpush1.msra.mxu0 0.0
    %2127 = vmatprep.subr.mxu0 0.0
    %2128 = vmatpush1.msra.mxu0 0.0
    %2129 = vmatprep.subr.mxu0 0.0
    %2130 = vmatpush1.msra.mxu0 0.0
    %2131 = vmatprep.subr.mxu0 0.0
    %2132 = vmatpush1.msra.mxu0 0.0
    %2133 = vmatprep.subr.mxu0 0.0
    %2134 = vmatpush1.msra.mxu0 0.0
    %2135 = vmatprep.subr.mxu0 0.0
    %2136 = vmatpush1.msra.mxu0 0.0
    %2137 = vmatprep.subr.mxu0 0.0
    %2138 = vmatpush1.msra.mxu0 0.0
    %2139 = vmatprep.subr.mxu0 0.0
    %2140 = vmatpush1.msra.mxu0 0.0
    %2141 = vmatprep.subr.mxu0 0.0
    %2142 = vmatpush1.msra.mxu0 0.0
    %2143 = vmatprep.subr.mxu0 0.0
    %2144 = vmatpush1.msra.mxu0 0.0
    %2145 = vmatprep.subr.mxu0 0.0
    %2146 = vmatpush1.msra.mxu0 0.0
    %2147 = vmatprep.subr.mxu0 0.0
    %2148 = vmatpush1.msra.mxu0 0.0
    %2149 = vmatprep.subr.mxu0 0.0
    %2150 = vmatpush1.msra.mxu0 0.0
    %2151 = vmatprep.subr.mxu0 0.0
    %2152 = vmatpush1.msra.mxu0 0.0
    %2153 = vmatprep.subr.mxu0 0.0
    %2154 = vmatpush1.msra.mxu0 0.0
    %2155 = vmatprep.subr.mxu0 0.0
    %2156 = vmatpush1.msra.mxu0 0.0
    %2157 = vmatprep.subr.mxu0 0.0
    %2158 = vmatpush1.msra.mxu0 0.0
    %2159 = vmatprep.subr.mxu0 0.0
    %2160 = vmatpush1.msra.mxu0 0.0
    %2161 = vmatprep.subr.mxu0 0.0
    %2162 = vmatpush1.msra.mxu0 0.0
    %2163 = vmatprep.subr.mxu0 0.0
    %2164 = vmatpush1.msra.mxu0 0.0
    %2165 = vmatprep.subr.mxu0 0.0
    %2166 = vmatpush1.msra.mxu0 0.0
    %2167 = vmatprep.subr.mxu0 0.0
    %2168 = vmatpush1.msra.mxu0 0.0
    %2169 = vmatprep.subr.mxu0 0.0
    %2170 = vmatpush1.msra.mxu0 0.0
    %2171 = vmatprep.subr.mxu0 0.0
    %2172 = vmatpush1.msra.mxu0 0.0
    %2173 = vmatprep.subr.mxu0 0.0
    %2174 = vmatpush1.msra.mxu0 0.0
    %2175 = vmatprep.subr.mxu0 0.0
    %2176 = vmatpush1.msra.mxu0 0.0
    %2177 = vmatprep.mubr.f32.mxu0 0.0
    %2178 = vmatmul.mubr.f32.gmra.mrb[0].mxu0 %v2016
    %v2179 = vpop.f32.mrb[0].mxu0
    %v2180 = vadd.f32 0.0, %v2179
    %v2181 = vpop.f32.mrb[0].mxu0
    %2182 = vdwg.mxu0
    %v2183 = vadd.f32 %v202, %v2180
    %v2184 = vxor.u32 %v2183, 2147483648
    %v2185 = vmul.f32 %v2184, 1.442695
    %v2186 = vpow.pop %v2185
    %v2187 = vadd.f32 %v2186, 1.0
    %v2188 = vrcp.pop %v2187
    %v2189 = vmul.f32 1.0, %v2188
    %v2190 = vtanh.pop %v2183
    %v2191 = vmul.f32 %v2189, %v1931
    %2193 = vrot.lane.b32.xlu0 %v2190, 64
    %v2194 = vpop.permute.xlu0 %2193
    %v2196 = vmul.f32 %v2189, %v2194
    %2198 = vrot.lane.b32.xlu0 %v2196, 32
    %v2199 = vpop.permute.xlu0 %2198
    %v2201 = vadd.f32 %v2191, %v2199
    %v2202 = vtanh.pop %v2201
    %2204 = vrot.lane.b32.xlu0 %v2202, 64
    %v2205 = vpop.permute.xlu0 %2204
    %v2207 = vmul.f32 %v2189, %v2205
    %2209 = vrot.lane.b32.xlu0 %v2112, 32
    %v2210 = vpop.permute.xlu0 %2209
    %v2211 = vsel %vm224, %v2210, 0
    %2213 = vmatprep.subr.mxu0 0.0
    %2214 = vmatpush1.msra.mxu0 %v213
    %2215 = vmatprep.subr.mxu0 0.0
    %2216 = vmatpush1.msra.mxu0 %v214
    %2217 = vmatprep.subr.mxu0 0.0
    %2218 = vmatpush1.msra.mxu0 %v215
    %2219 = vmatprep.subr.mxu0 0.0
    %2220 = vmatpush1.msra.mxu0 %v216
    %2221 = vmatprep.subr.mxu0 0.0
    %2222 = vmatpush1.msra.mxu0 0.0
    %2223 = vmatprep.subr.mxu0 0.0
    %2224 = vmatpush1.msra.mxu0 0.0
    %2225 = vmatprep.subr.mxu0 0.0
    %2226 = vmatpush1.msra.mxu0 0.0
    %2227 = vmatprep.subr.mxu0 0.0
    %2228 = vmatpush1.msra.mxu0 0.0
    %2229 = vmatprep.subr.mxu0 0.0
    %2230 = vmatpush1.msra.mxu0 0.0
    %2231 = vmatprep.subr.mxu0 0.0
    %2232 = vmatpush1.msra.mxu0 0.0
    %2233 = vmatprep.subr.mxu0 0.0
    %2234 = vmatpush1.msra.mxu0 0.0
    %2235 = vmatprep.subr.mxu0 0.0
    %2236 = vmatpush1.msra.mxu0 0.0
    %2237 = vmatprep.subr.mxu0 0.0
    %2238 = vmatpush1.msra.mxu0 0.0
    %2239 = vmatprep.subr.mxu0 0.0
    %2240 = vmatpush1.msra.mxu0 0.0
    %2241 = vmatprep.subr.mxu0 0.0
    %2242 = vmatpush1.msra.mxu0 0.0
    %2243 = vmatprep.subr.mxu0 0.0
    %2244 = vmatpush1.msra.mxu0 0.0
    %2245 = vmatprep.subr.mxu0 0.0
    %2246 = vmatpush1.msra.mxu0 0.0
    %2247 = vmatprep.subr.mxu0 0.0
    %2248 = vmatpush1.msra.mxu0 0.0
    %2249 = vmatprep.subr.mxu0 0.0
    %2250 = vmatpush1.msra.mxu0 0.0
    %2251 = vmatprep.subr.mxu0 0.0
    %2252 = vmatpush1.msra.mxu0 0.0
    %2253 = vmatprep.subr.mxu0 0.0
    %2254 = vmatpush1.msra.mxu0 0.0
    %2255 = vmatprep.subr.mxu0 0.0
    %2256 = vmatpush1.msra.mxu0 0.0
    %2257 = vmatprep.subr.mxu0 0.0
    %2258 = vmatpush1.msra.mxu0 0.0
    %2259 = vmatprep.subr.mxu0 0.0
    %2260 = vmatpush1.msra.mxu0 0.0
    %2261 = vmatprep.subr.mxu0 0.0
    %2262 = vmatpush1.msra.mxu0 0.0
    %2263 = vmatprep.subr.mxu0 0.0
    %2264 = vmatpush1.msra.mxu0 0.0
    %2265 = vmatprep.subr.mxu0 0.0
    %2266 = vmatpush1.msra.mxu0 0.0
    %2267 = vmatprep.subr.mxu0 0.0
    %2268 = vmatpush1.msra.mxu0 0.0
    %2269 = vmatprep.subr.mxu0 0.0
    %2270 = vmatpush1.msra.mxu0 0.0
    %2271 = vmatprep.subr.mxu0 0.0
    %2272 = vmatpush1.msra.mxu0 0.0
    %2273 = vmatprep.subr.mxu0 0.0
    %2274 = vmatpush1.msra.mxu0 0.0
    %2275 = vmatprep.subr.mxu0 0.0
    %2276 = vmatpush1.msra.mxu0 0.0
    %2277 = vmatprep.mubr.f32.mxu0 0.0
    %2278 = vmatmul.mubr.f32.gmra.mrb[0].mxu0 %v2211
    %v2279 = vpop.f32.mrb[0].mxu0
    %v2280 = vadd.f32 0.0, %v2279
    %v2281 = vpop.f32.mrb[0].mxu0
    %2282 = vdwg.mxu0
    %2284 = vrot.lane.b32.xlu0 %v2207, 32
    %v2285 = vpop.permute.xlu0 %2284
    %v2286 = vsel %vm224, %v2285, 0
    %2288 = vmatprep.subr.mxu0 0.0
    %2289 = vmatpush1.msra.mxu0 %v209
    %2290 = vmatprep.subr.mxu0 0.0
    %2291 = vmatpush1.msra.mxu0 %v210
    %2292 = vmatprep.subr.mxu0 0.0
    %2293 = vmatpush1.msra.mxu0 %v211
    %2294 = vmatprep.subr.mxu0 0.0
    %2295 = vmatpush1.msra.mxu0 %v212
    %2296 = vmatprep.subr.mxu0 0.0
    %2297 = vmatpush1.msra.mxu0 0.0
    %2298 = vmatprep.subr.mxu0 0.0
    %2299 = vmatpush1.msra.mxu0 0.0
    %2300 = vmatprep.subr.mxu0 0.0
    %2301 = vmatpush1.msra.mxu0 0.0
    %2302 = vmatprep.subr.mxu0 0.0
    %2303 = vmatpush1.msra.mxu0 0.0
    %2304 = vmatprep.subr.mxu0 0.0
    %2305 = vmatpush1.msra.mxu0 0.0
    %2306 = vmatprep.subr.mxu0 0.0
    %2307 = vmatpush1.msra.mxu0 0.0
    %2308 = vmatprep.subr.mxu0 0.0
    %2309 = vmatpush1.msra.mxu0 0.0
    %2310 = vmatprep.subr.mxu0 0.0
    %2311 = vmatpush1.msra.mxu0 0.0
    %2312 = vmatprep.subr.mxu0 0.0
    %2313 = vmatpush1.msra.mxu0 0.0
    %2314 = vmatprep.subr.mxu0 0.0
    %2315 = vmatpush1.msra.mxu0 0.0
    %2316 = vmatprep.subr.mxu0 0.0
    %2317 = vmatpush1.msra.mxu0 0.0
    %2318 = vmatprep.subr.mxu0 0.0
    %2319 = vmatpush1.msra.mxu0 0.0
    %2320 = vmatprep.subr.mxu0 0.0
    %2321 = vmatpush1.msra.mxu0 0.0
    %2322 = vmatprep.subr.mxu0 0.0
    %2323 = vmatpush1.msra.mxu0 0.0
    %2324 = vmatprep.subr.mxu0 0.0
    %2325 = vmatpush1.msra.mxu0 0.0
    %2326 = vmatprep.subr.mxu0 0.0
    %2327 = vmatpush1.msra.mxu0 0.0
    %2328 = vmatprep.subr.mxu0 0.0
    %2329 = vmatpush1.msra.mxu0 0.0
    %2330 = vmatprep.subr.mxu0 0.0
    %2331 = vmatpush1.msra.mxu0 0.0
    %2332 = vmatprep.subr.mxu0 0.0
    %2333 = vmatpush1.msra.mxu0 0.0
    %2334 = vmatprep.subr.mxu0 0.0
    %2335 = vmatpush1.msra.mxu0 0.0
    %2336 = vmatprep.subr.mxu0 0.0
    %2337 = vmatpush1.msra.mxu0 0.0
    %2338 = vmatprep.subr.mxu0 0.0
    %2339 = vmatpush1.msra.mxu0 0.0
    %2340 = vmatprep.subr.mxu0 0.0
    %2341 = vmatpush1.msra.mxu0 0.0
    %2342 = vmatprep.subr.mxu0 0.0
    %2343 = vmatpush1.msra.mxu0 0.0
    %2344 = vmatprep.subr.mxu0 0.0
    %2345 = vmatpush1.msra.mxu0 0.0
    %2346 = vmatprep.subr.mxu0 0.0
    %2347 = vmatpush1.msra.mxu0 0.0
    %2348 = vmatprep.subr.mxu0 0.0
    %2349 = vmatpush1.msra.mxu0 0.0
    %2350 = vmatprep.subr.mxu0 0.0
    %2351 = vmatpush1.msra.mxu0 0.0
    %2352 = vmatprep.mubr.f32.mxu0 0.0
    %2353 = vmatmul.mubr.f32.gmra.mrb[0].mxu0 %v2286
    %v2354 = vpop.f32.mrb[0].mxu0
    %v2355 = vadd.f32 %v2280, %v2354
    %v2356 = vpop.f32.mrb[0].mxu0
    %2357 = vdwg.mxu0
    %v2358 = vadd.f32 %v2355, %v222
    %v2359 = vxor.u32 %v2358, 2147483648
    %v2360 = vmul.f32 %v2359, 1.442695
    %v2361 = vpow.pop %v2360
    %v2362 = vadd.f32 %v2361, 1.0
    %v2363 = vrcp.pop %v2362
    %v2364 = vmul.f32 1.0, %v2363
    %v2365 = vtanh.pop %v2358
    %v2366 = vmul.f32 %v2364, %v2106
    %2368 = vrot.lane.b32.xlu0 %v2365, 64
    %v2369 = vpop.permute.xlu0 %2368
    %v2371 = vmul.f32 %v2364, %v2369
    %2373 = vrot.lane.b32.xlu0 %v2371, 32
    %v2374 = vpop.permute.xlu0 %2373
    %v2376 = vadd.f32 %v2366, %v2374
    %v2377 = vtanh.pop %v2376
    %2379 = vrot.lane.b32.xlu0 %v2377, 64
    %v2380 = vpop.permute.xlu0 %2379
    %v2382 = vmul.f32 %v2364, %v2380
    %v2383 = vld [vmem:[%s7] sm:$0xff]
    %v2384 = vld [vmem:[%s7 + $0x8] sm:$0xff]
    %v2385 = vld [vmem:[%s7 + $0x10] sm:$0xff]
    %v2386 = vld [vmem:[%s7 + $0x18] sm:$0xff]
    %v2387 = vld [vmem:[%s8] sm:$0x1]
    %v2389 = vlaneseq
    %v2390 = vshrl.u32 %v2389, 7
    %v2391 = vsub.s32 0, %v2390
    %v2392 = vrot.slane %v2387, %v2391
    %2395 = vrot.lane.b32.xlu0 %v2382, 32
    %v2396 = vpop.permute.xlu0 %2395
    %v2397 = vsel %vm224, %v2396, 0
    %2399 = vmatprep.subr.mxu0 0.0
    %2400 = vmatpush1.msra.mxu0 %v2383
    %2401 = vmatprep.subr.mxu0 0.0
    %2402 = vmatpush1.msra.mxu0 %v2384
    %2403 = vmatprep.subr.mxu0 0.0
    %2404 = vmatpush1.msra.mxu0 %v2385
    %2405 = vmatprep.subr.mxu0 0.0
    %2406 = vmatpush1.msra.mxu0 %v2386
    %2407 = vmatprep.subr.mxu0 0.0
    %2408 = vmatpush1.msra.mxu0 0.0
    %2409 = vmatprep.subr.mxu0 0.0
    %2410 = vmatpush1.msra.mxu0 0.0
    %2411 = vmatprep.subr.mxu0 0.0
    %2412 = vmatpush1.msra.mxu0 0.0
    %2413 = vmatprep.subr.mxu0 0.0
    %2414 = vmatpush1.msra.mxu0 0.0
    %2415 = vmatprep.subr.mxu0 0.0
    %2416 = vmatpush1.msra.mxu0 0.0
    %2417 = vmatprep.subr.mxu0 0.0
    %2418 = vmatpush1.msra.mxu0 0.0
    %2419 = vmatprep.subr.mxu0 0.0
    %2420 = vmatpush1.msra.mxu0 0.0
    %2421 = vmatprep.subr.mxu0 0.0
    %2422 = vmatpush1.msra.mxu0 0.0
    %2423 = vmatprep.subr.mxu0 0.0
    %2424 = vmatpush1.msra.mxu0 0.0
    %2425 = vmatprep.subr.mxu0 0.0
    %2426 = vmatpush1.msra.mxu0 0.0
    %2427 = vmatprep.subr.mxu0 0.0
    %2428 = vmatpush1.msra.mxu0 0.0
    %2429 = vmatprep.subr.mxu0 0.0
    %2430 = vmatpush1.msra.mxu0 0.0
    %2431 = vmatprep.subr.mxu0 0.0
    %2432 = vmatpush1.msra.mxu0 0.0
    %2433 = vmatprep.subr.mxu0 0.0
    %2434 = vmatpush1.msra.mxu0 0.0
    %2435 = vmatprep.subr.mxu0 0.0
    %2436 = vmatpush1.msra.mxu0 0.0
    %2437 = vmatprep.subr.mxu0 0.0
    %2438 = vmatpush1.msra.mxu0 0.0
    %2439 = vmatprep.subr.mxu0 0.0
    %2440 = vmatpush1.msra.mxu0 0.0
    %2441 = vmatprep.subr.mxu0 0.0
    %2442 = vmatpush1.msra.mxu0 0.0
    %2443 = vmatprep.subr.mxu0 0.0
    %2444 = vmatpush1.msra.mxu0 0.0
    %2445 = vmatprep.subr.mxu0 0.0
    %2446 = vmatpush1.msra.mxu0 0.0
    %2447 = vmatprep.subr.mxu0 0.0
    %2448 = vmatpush1.msra.mxu0 0.0
    %2449 = vmatprep.subr.mxu0 0.0
    %2450 = vmatpush1.msra.mxu0 0.0
    %2451 = vmatprep.subr.mxu0 0.0
    %2452 = vmatpush1.msra.mxu0 0.0
    %2453 = vmatprep.subr.mxu0 0.0
    %2454 = vmatpush1.msra.mxu0 0.0
    %2455 = vmatprep.subr.mxu0 0.0
    %2456 = vmatpush1.msra.mxu0 0.0
    %2457 = vmatprep.subr.mxu0 0.0
    %2458 = vmatpush1.msra.mxu0 0.0
    %2459 = vmatprep.subr.mxu0 0.0
    %2460 = vmatpush1.msra.mxu0 0.0
    %2461 = vmatprep.subr.mxu0 0.0
    %2462 = vmatpush1.msra.mxu0 0.0
    %2463 = vmatprep.mubr.f32.mxu0 0.0
    %2464 = vmatmul.mubr.f32.gmra.mrb[0].mxu0 %v2397
    %v2465 = vpop.f32.mrb[0].mxu0
    %v2466 = vadd.f32 %v2392, %v2465
    %v2467 = vpop.f32.mrb[0].mxu0
    %2468 = vdwg.mxu0
    %2469 = vst [vmem:[#allocation7] sm:$0xff] %v2466
    // Predicated region
    $region46: #{tpu_custom_call.1} parent=1 // pred_check
      _
    $region47: #{tpu_custom_call.1} parent=1 // pred_check_branch
      %2471 = sbr.rel (0) target = $region49
    $region48: #{tpu_custom_call.1} parent=1 // pred_region
      %s2473 = ssub.s32 128, 128
      %2474 = vsyncadd [#allocation4], %s2473
      %s2476 = sshll.u32 [#allocation7], 4
      %s2477 = int_to_ptr.vmem [resolvable:$true] %s2476
      %2479 = dma.vmem_to_hbm [thread:$0]  %s2477, 128, %s9, [#allocation4]
    $region49: #{tpu_custom_call.1} parent=1 // pred_fallthru
      _
    // Predicated region
    $region50: #{tpu_custom_call.1} parent=1 // pred_check
      _
    $region51: #{tpu_custom_call.1} parent=1 // pred_check_branch
      %2481 = sbr.rel (0) target = $region53
    $region52: #{tpu_custom_call.1} parent=1 // pred_region
      %2482 = dma.done [#allocation4], 128
    $region53: #{tpu_custom_call.1} parent=1 // pred_fallthru
      _
    %2483 = vsyncpa [#allocation3], 1
    %2484 = vsyncpa [#allocation6], 1
    %2485 = vsyncpa [#allocation4], 1

</llo_original>
